<compile_context>
chip_gen: v6e
topology: v6e:2x2x1
jax: 0.10.0
libtpu: 0.0.40
codegen_flags: <defaults>
</compile_context>

<pallas_src>
import functools

import jax
import jax.numpy as jnp
from jax.experimental import pallas as pl
from jax.experimental.pallas import tpu as pltpu

LANE = 128


# ----------------------------------------------------------------------------
# helpers
# ----------------------------------------------------------------------------
def _round_up(x, m):
    return ((x + m - 1) // m) * m


def _pad_to(a, shape):
    pads = [(0, t - s) for s, t in zip(a.shape, shape)]
    return jnp.pad(a, pads)


def _tiles_for_npad(n_pad):
    """(tm, tk) for the [n_pad, n_pad] aggregation matmul."""
    if n_pad <= 512:
        tk = n_pad
        # Split the row axis into >=2 tiles when possible so v7x's 2 TensorCores
        # both get work (single-block grids pin the conv to one core).
        tm = n_pad // 2 if n_pad >= 256 else n_pad
        return tm, tk
    return 512, 1024


def _tiling(n):
    """Pick (n_pad, tm, tk); n_pad is a multiple of both tm and tk."""
    n_pad = _round_up(n, 128) if n <= 512 else _round_up(n, 1024)
    tm, tk = _tiles_for_npad(n_pad)
    return n_pad, tm, tk


def _vmem_limit_bytes():
    # v5e/v6e have 128 MiB physical VMEM -> raise the scoped cap; fall back to a
    # conservative 32 MiB (safe on v7x's 64 MiB) if the query is unavailable.
    try:
        cap = int(pltpu.get_tpu_info().vmem_capacity_bytes)
        return max(32 * 1024 * 1024, min(cap // 2, 96 * 1024 * 1024))
    except Exception:
        return 32 * 1024 * 1024


# ----------------------------------------------------------------------------
# Feature transform kernel:  XW = X @ W   (bf16 MXU, f32 accumulate, bf16 out)
# ----------------------------------------------------------------------------
def _xw_kernel(x_ref, w_ref, o_ref):
    o_ref[...] = jnp.dot(x_ref[...], w_ref[...],
                         preferred_element_type=jnp.float32).astype(o_ref.dtype)


def feature_transform(x, w, *, tm, vmem_limit):
    n_pad, fin_pad = x.shape
    fout_pad = w.shape[1]
    return pl.pallas_call(
        _xw_kernel,
        out_shape=jax.ShapeDtypeStruct((n_pad, fout_pad), jnp.bfloat16),
        grid_spec=pltpu.PrefetchScalarGridSpec(
            num_scalar_prefetch=0,
            grid=(n_pad // tm,),
            in_specs=[
                pl.BlockSpec((tm, fin_pad), lambda i: (i, 0)),
                pl.BlockSpec((fin_pad, fout_pad), lambda i: (0, 0)),
            ],
            out_specs=pl.BlockSpec((tm, fout_pad), lambda i: (i, 0)),
        ),
        compiler_params=pltpu.CompilerParams(
            dimension_semantics=("parallel",),
            vmem_limit_bytes=vmem_limit,
        ),
    )(x, w)


# ----------------------------------------------------------------------------
# Aggregation kernel:  out = Â @ XW + b   (optional fused ReLU epilogue)
# ----------------------------------------------------------------------------
def _agg_kernel(adj_ref, xw_ref, b_ref, o_ref, acc_ref, *, apply_relu):
    # adj: [TM, TK] bf16   xw: [TK, Fout] bf16 (precomputed X @ W)
    # b: [1, Fout] f32     o: [TM, Fout]       acc: [TM, Fout] f32 scratch
    k = pl.program_id(1)

    @pl.when(k == 0)
    def _init():
        acc_ref[...] = jnp.zeros_like(acc_ref)

    acc_ref[...] += jnp.dot(adj_ref[...], xw_ref[...],
                            preferred_element_type=jnp.float32)

    # Bias + activation once, after the full K reduction (f32 epilogue).
    @pl.when(k == pl.num_programs(1) - 1)
    def _finalize():
        h = acc_ref[...] + b_ref[...]
        if apply_relu:
            h = jnp.maximum(h, 0.0)
        o_ref[...] = h.astype(o_ref.dtype)


def aggregate(adj, xw, b, *, apply_relu, tm, tk, out_dtype, vmem_limit):
    n_pad = adj.shape[0]
    fout_pad = xw.shape[1]
    grid = (n_pad // tm, n_pad // tk)
    return pl.pallas_call(
        functools.partial(_agg_kernel, apply_relu=apply_relu),
        out_shape=jax.ShapeDtypeStruct((n_pad, fout_pad), out_dtype),
        grid_spec=pltpu.PrefetchScalarGridSpec(
            num_scalar_prefetch=0,
            grid=grid,
            in_specs=[
                pl.BlockSpec((tm, tk), lambda i, k: (i, k)),        # Â tile
                pl.BlockSpec((tk, fout_pad), lambda i, k: (k, 0)),  # XW rows for k
                pl.BlockSpec((1, fout_pad), lambda i, k: (0, 0)),
            ],
            out_specs=pl.BlockSpec((tm, fout_pad), lambda i, k: (i, 0)),
            scratch_shapes=[pltpu.VMEM((tm, fout_pad), jnp.float32)],
        ),
        compiler_params=pltpu.CompilerParams(
            dimension_semantics=("parallel", "arbitrary"),
            vmem_limit_bytes=vmem_limit,
        ),
    )(adj, xw, b)


# ----------------------------------------------------------------------------
# Decode kernel: edge-tiled in-kernel gather of z[u], z[v] + 2-layer MLP,
# lane-dense logits output ([TE,128] slab, real weights in lane 0).
# ----------------------------------------------------------------------------
def _decode_kernel(u_ref, v_ref, z_ref, wc1_ref, bc1_ref, wc2_ref, bc2_ref,
                   o_ref, zuv_ref):
    # u/v: SMEM int32 [E_pad] (scalar-prefetched)     z: [N_pad, H_pad] f32 (VMEM)
    # wc1: [2*H_pad, H_pad] bf16   bc1: [1, H_pad] f32
    # wc2: [H_pad, 128] bf16       bc2: [1, 128] f32
    # o: [TE, 128] f32             zuv scratch: [TE, 2*H_pad] f32
    te, two_h = zuv_ref.shape
    h_pad = two_h // 2
    base = pl.program_id(0) * te

    def gather_row(e, carry):
        g = base + e
        # u and v row copies issued back-to-back per edge.
        zuv_ref[pl.ds(e, 1), pl.ds(0, h_pad)] = z_ref[pl.ds(u_ref[g], 1), :]
        zuv_ref[pl.ds(e, 1), pl.ds(h_pad, h_pad)] = z_ref[pl.ds(v_ref[g], 1), :]
        return carry

    jax.lax.fori_loop(0, te, gather_row, 0, unroll=8)

    # bf16 MXU matmuls with f32 accumulation; f32 bias/ReLU epilogues.
    h1 = jnp.dot(zuv_ref[...].astype(jnp.bfloat16), wc1_ref[...],
                 preferred_element_type=jnp.float32)
    h1 = jnp.maximum(h1 + bc1_ref[...], 0.0)
    o = jnp.dot(h1.astype(jnp.bfloat16), wc2_ref[...],
                preferred_element_type=jnp.float32)
    o_ref[...] = o + bc2_ref[...]


def decode_mlp(z, u_idx, v_idx, consts, *, vmem_limit):
    # NOTE: for very large N, z should stay in HBM (memory_space=pl.ANY) with a
    # manual DMA row-gather instead of a whole-z VMEM block; fine at these sizes.
    n_pad, h_pad = z.shape
    e = u_idx.shape[0]
    te = min(256, _round_up(max(e, 1), 8))
    e_pad = _round_up(max(e, 1), te)

    u_p = _pad_to(u_idx.astype(jnp.int32), (e_pad,))
    v_p = _pad_to(v_idx.astype(jnp.int32), (e_pad,))

    out = pl.pallas_call(
        _decode_kernel,
        out_shape=jax.ShapeDtypeStruct((e_pad, LANE), jnp.float32),
        grid_spec=pltpu.PrefetchScalarGridSpec(
            num_scalar_prefetch=2,
            grid=(e_pad // te,),
            in_specs=[
                pl.BlockSpec((n_pad, h_pad), lambda i, u, v: (0, 0)),
                pl.BlockSpec((2 * h_pad, h_pad), lambda i, u, v: (0, 0)),
                pl.BlockSpec((1, h_pad), lambda i, u, v: (0, 0)),
                pl.BlockSpec((h_pad, LANE), lambda i, u, v: (0, 0)),
                pl.BlockSpec((1, LANE), lambda i, u, v: (0, 0)),
            ],
            out_specs=pl.BlockSpec((te, LANE), lambda i, u, v: (i, 0)),
            scratch_shapes=[pltpu.VMEM((te, 2 * h_pad), jnp.float32)],
        ),
        compiler_params=pltpu.CompilerParams(
            dimension_semantics=("parallel",),
            vmem_limit_bytes=vmem_limit,
        ),
    )(u_p, v_p, z, consts["wc1"], consts["bc1"], consts["wc2"], consts["bc2"])
    return out[:e, 0]


# ----------------------------------------------------------------------------
# One-time preparation (padding, bf16 casts, decode weight repacks) — hoisted
# out of the per-call forward path.
# ----------------------------------------------------------------------------
def prepare(params, adj_norm, x):
    n = adj_norm.shape[0]
    in_feats = x.shape[1]
    hidden = params["w2"].shape[1]

    n_pad, _, _ = _tiling(n)
    fin_pad = _round_up(in_feats, LANE)
    h_pad = _round_up(hidden, LANE)

    consts = {
        "adj": _pad_to(adj_norm, (n_pad, n_pad)).astype(jnp.bfloat16),
        "x": _pad_to(x, (n_pad, fin_pad)).astype(jnp.bfloat16),
        "w1": _pad_to(params["w1"], (fin_pad, h_pad)).astype(jnp.bfloat16),
        "b1": _pad_to(params["b1"].reshape(1, -1), (1, h_pad)).astype(jnp.float32),
        "w2": _pad_to(params["w2"], (h_pad, h_pad)).astype(jnp.bfloat16),
        "b2": _pad_to(params["b2"].reshape(1, -1), (1, h_pad)).astype(jnp.float32),
    }

    # wc1 rows 0:hidden multiply z[u], rows hidden:2*hidden multiply z[v]; re-place
    # them to match the padded concatenation layout [0:H_pad | H_pad:2*H_pad].
    wc1 = params["wc1"]
    wc1_p = jnp.zeros((2 * h_pad, h_pad), jnp.float32)
    wc1_p = wc1_p.at[:hidden, :hidden].set(wc1[:hidden])
    wc1_p = wc1_p.at[h_pad:h_pad + hidden, :hidden].set(wc1[hidden:])
    consts["wc1"] = wc1_p.astype(jnp.bfloat16)
    consts["bc1"] = _pad_to(params["bc1"].reshape(1, -1),
                            (1, h_pad)).astype(jnp.float32)
    # Full 128-lane slab so the final logit store is an unmasked lane-dense vst;
    # real weights live in column 0.
    wc2_slab = jnp.zeros((h_pad, LANE), jnp.float32).at[:hidden, 0].set(
        params["wc2"][:, 0])
    consts["wc2"] = wc2_slab.astype(jnp.bfloat16)
    consts["bc2"] = jnp.full((1, LANE), params["bc2"].reshape(()), jnp.float32)
    return consts


# ----------------------------------------------------------------------------
# Forward
# ----------------------------------------------------------------------------
def gnn_forward(consts, u, v):
    adj = consts["adj"]
    n_pad = adj.shape[0]
    tm, tk = _tiles_for_npad(n_pad)
    vmem_limit = _vmem_limit_bytes()

    # encode: conv1 -> relu (fused epilogue) -> conv2, each as XW precompute + Â agg
    xw1 = feature_transform(consts["x"], consts["w1"], tm=tm, vmem_limit=vmem_limit)
    h = aggregate(adj, xw1, consts["b1"], apply_relu=True, tm=tm, tk=tk,
                  out_dtype=jnp.bfloat16, vmem_limit=vmem_limit)
    xw2 = feature_transform(h, consts["w2"], tm=tm, vmem_limit=vmem_limit)
    z = aggregate(adj, xw2, consts["b2"], apply_relu=False, tm=tm, tk=tk,
                  out_dtype=jnp.float32, vmem_limit=vmem_limit)

    # decode: edge-tiled in-kernel gather (scalar-prefetched u, v) + MLP classifier.
    return decode_mlp(z, u, v, consts, vmem_limit=vmem_limit)  # [E]


# ----------------------------------------------------------------------------
# Parameter / input construction
# ----------------------------------------------------------------------------
def init_params(key, in_feats, hidden_feats):
    ks = jax.random.split(key, 6)
    scale = 0.1
    return {
        "w1": scale * jax.random.normal(ks[0], (in_feats, hidden_feats), jnp.float32),
        "b1": jnp.zeros((hidden_feats,), jnp.float32),
        "w2": scale * jax.random.normal(ks[1], (hidden_feats, hidden_feats), jnp.float32),
        "b2": jnp.zeros((hidden_feats,), jnp.float32),
        "wc1": scale * jax.random.normal(ks[2], (2 * hidden_feats, hidden_feats), jnp.float32),
        "bc1": scale * jax.random.normal(ks[3], (hidden_feats,), jnp.float32),
        "wc2": scale * jax.random.normal(ks[4], (hidden_feats, 1), jnp.float32),
        "bc2": scale * jax.random.normal(ks[5], (1,), jnp.float32),
    }


def normalized_adjacency(key, n_nodes):
    # Random symmetric graph with self-loops, then Â = D^-1/2 A D^-1/2
    # (DGL GraphConv norm='both').
    a = (jax.random.uniform(key, (n_nodes, n_nodes)) > 0.6).astype(jnp.float32)
    a = jnp.maximum(a, a.T)
    a = jnp.maximum(a, jnp.eye(n_nodes, dtype=jnp.float32))
    deg = jnp.sum(a, axis=1)
    d_inv_sqrt = 1.0 / jnp.sqrt(deg)
    return a * d_inv_sqrt[:, None] * d_inv_sqrt[None, :]


if __name__ == "__main__":
    N_NODES = 16
    IN_FEATS = 8
    HIDDEN = 16
    N_EDGES = 8

    key = jax.random.PRNGKey(0)
    k_adj, k_x, k_u, k_v, k_p = jax.random.split(key, 5)

    adj_norm = normalized_adjacency(k_adj, N_NODES)
    x = jax.random.normal(k_x, (N_NODES, IN_FEATS), jnp.float32)
    u = jax.random.randint(k_u, (N_EDGES,), 0, N_NODES)
    v = jax.random.randint(k_v, (N_EDGES,), 0, N_NODES)
    params = init_params(k_p, IN_FEATS, HIDDEN)

    # One-time setup (padding, bf16 casts, decode weight repacks) outside jit.
    consts = prepare(params, adj_norm, x)

    fwd = jax.jit(gnn_forward)
    out = fwd(consts, u, v)
    jax.block_until_ready(out)
    assert out.shape == (N_EDGES,), out.shape
    assert bool(jnp.all(jnp.isfinite(out)))
    print("KERNEL_OK")
</pallas_src>

<mosaic_0001>
module attributes {stable_mosaic.version = 11 : i64} {
  func.func @_agg_kernel(%arg0: i32, %arg1: i32, %arg2: memref<128x128xbf16, #tpu.memory_space<vmem>>, %arg3: memref<128x128xbf16, #tpu.memory_space<vmem>>, %arg4: memref<1x128xf32, #tpu.memory_space<vmem>>, %arg5: memref<128x128xbf16, #tpu.memory_space<vmem>>, %arg6: memref<128x128xf32, #tpu.memory_space<vmem>>) attributes {dimension_semantics = [#tpu.dimension_semantics<parallel>, #tpu.dimension_semantics<arbitrary>], iteration_bounds = array<i64: 1, 1>, scalar_prefetch = 0 : i64, scratch_operands = 1 : i64, tpu.core_type = #tpu.core_type<tc>, window_params = [{transform_indices = @transform_0, window_bounds = array<i64: 128, 128>}, {transform_indices = @transform_1, window_bounds = array<i64: 128, 128>}, {pipeline_mode = #tpu.pipeline_mode<synchronous>, transform_indices = @transform_2, window_bounds = array<i64: 1, 128>}, {transform_indices = @transform_3, window_bounds = array<i64: 128, 128>}]} {
    %c0_i32 = arith.constant 0 : i32
    %0 = arith.cmpi eq, %arg1, %c0_i32 : i32
    %1 = arith.extui %0 : i1 to i32
    %c0_i32_0 = arith.constant 0 : i32
    %2 = arith.cmpi ne, %1, %c0_i32_0 : i32
    scf.if %2 {
      %cst_10 = arith.constant 0.000000e+00 : f32
      %12 = vector.broadcast %cst_10 : f32 to vector<128x128xf32>
      %c0_11 = arith.constant 0 : index
      %c0_12 = arith.constant 0 : index
      %13 = vector.load %arg6[%c0_11, %c0_12] : memref<128x128xf32, #tpu.memory_space<vmem>>, vector<128x128xf32>
      tpu.vector_store %arg6[%c0_11, %c0_12], %12 {strides = array<i32>} : memref<128x128xf32, #tpu.memory_space<vmem>>, vector<128x128xf32>,
    } else {
    }
    %c0 = arith.constant 0 : index
    %c0_1 = arith.constant 0 : index
    %3 = vector.load %arg6[%c0, %c0_1] : memref<128x128xf32, #tpu.memory_space<vmem>>, vector<128x128xf32>
    %c0_2 = arith.constant 0 : index
    %c0_3 = arith.constant 0 : index
    %4 = vector.load %arg2[%c0_2, %c0_3] : memref<128x128xbf16, #tpu.memory_space<vmem>>, vector<128x128xbf16>
    %c0_4 = arith.constant 0 : index
    %c0_5 = arith.constant 0 : index
    %5 = vector.load %arg3[%c0_4, %c0_5] : memref<128x128xbf16, #tpu.memory_space<vmem>>, vector<128x128xbf16>
    %cst = arith.constant dense<0.000000e+00> : vector<128x128xf32>
    %6 = tpu.matmul %4, %5, %cst {dimension_numbers = #tpu.dot_dimension_numbers<[1], [0], [0], [1], [0, 0, 1, 1], [], []>} : vector<128x128xbf16>, vector<128x128xbf16>, vector<128x128xf32> -> vector<128x128xf32>
    %7 = arith.addf %3, %6 : vector<128x128xf32>
    %c0_6 = arith.constant 0 : index
    %c0_7 = arith.constant 0 : index
    %8 = vector.load %arg6[%c0_6, %c0_7] : memref<128x128xf32, #tpu.memory_space<vmem>>, vector<128x128xf32>
    tpu.vector_store %arg6[%c0_6, %c0_7], %7 {strides = array<i32>} : memref<128x128xf32, #tpu.memory_space<vmem>>, vector<128x128xf32>,
    %c0_i32_8 = arith.constant 0 : i32
    %9 = arith.cmpi eq, %arg1, %c0_i32_8 : i32
    %10 = arith.extui %9 : i1 to i32
    %c0_i32_9 = arith.constant 0 : i32
    %11 = arith.cmpi ne, %10, %c0_i32_9 : i32
    scf.if %11 {
      %c0_10 = arith.constant 0 : index
      %c0_11 = arith.constant 0 : index
      %12 = vector.load %arg6[%c0_10, %c0_11] : memref<128x128xf32, #tpu.memory_space<vmem>>, vector<128x128xf32>
      %c0_12 = arith.constant 0 : index
      %c0_13 = arith.constant 0 : index
      %13 = vector.load %arg4[%c0_12, %c0_13] : memref<1x128xf32, #tpu.memory_space<vmem>>, vector<1x128xf32>
      %14 = vector.broadcast %13 : vector<1x128xf32> to vector<128x128xf32>
      %15 = arith.addf %12, %14 : vector<128x128xf32>
      %cst_14 = arith.constant 0.000000e+00 : f32
      %16 = vector.broadcast %cst_14 : f32 to vector<128x128xf32>
      %17 = arith.maximumf %15, %16 : vector<128x128xf32>
      %18 = arith.truncf %17 : vector<128x128xf32> to vector<128x128xbf16>
      %c0_15 = arith.constant 0 : index
      %c0_16 = arith.constant 0 : index
      %19 = vector.load %arg5[%c0_15, %c0_16] : memref<128x128xbf16, #tpu.memory_space<vmem>>, vector<128x128xbf16>
      tpu.vector_store %arg5[%c0_15, %c0_16], %18 {strides = array<i32>} : memref<128x128xbf16, #tpu.memory_space<vmem>>, vector<128x128xbf16>,
    } else {
    }
    return
  }
  func.func @transform_0(%arg0: i32, %arg1: i32) -> (i32, i32) {
    %c0_i32 = arith.constant 0 : i32
    return %arg0, %arg1 : i32, i32
  }
  func.func @transform_1(%arg0: i32, %arg1: i32) -> (i32, i32) {
    %c0_i32 = arith.constant 0 : i32
    %c0_i32_0 = arith.constant 0 : i32
    return %arg1, %c0_i32 : i32, i32
  }
  func.func @transform_2(%arg0: i32, %arg1: i32) -> (i32, i32) {
    %c0_i32 = arith.constant 0 : i32
    %c0_i32_0 = arith.constant 0 : i32
    %c0_i32_1 = arith.constant 0 : i32
    return %c0_i32, %c0_i32_0 : i32, i32
  }
  func.func @transform_3(%arg0: i32, %arg1: i32) -> (i32, i32) {
    %c0_i32 = arith.constant 0 : i32
    %c0_i32_0 = arith.constant 0 : i32
    return %arg0, %c0_i32 : i32, i32
  }
}

module attributes {stable_mosaic.version = 11 : i64} {
  func.func @_xw_kernel(%arg0: i32, %arg1: memref<128x128xbf16, #tpu.memory_space<vmem>>, %arg2: memref<128x128xbf16, #tpu.memory_space<vmem>>, %arg3: memref<128x128xbf16, #tpu.memory_space<vmem>>) attributes {dimension_semantics = [#tpu.dimension_semantics<parallel>], iteration_bounds = array<i64: 1>, scalar_prefetch = 0 : i64, scratch_operands = 0 : i64, tpu.core_type = #tpu.core_type<tc>, window_params = [{transform_indices = @transform_0, window_bounds = array<i64: 128, 128>}, {pipeline_mode = #tpu.pipeline_mode<synchronous>, transform_indices = @transform_1, window_bounds = array<i64: 128, 128>}, {transform_indices = @transform_2, window_bounds = array<i64: 128, 128>}]} {
    %c0 = arith.constant 0 : index
    %c0_0 = arith.constant 0 : index
    %0 = vector.load %arg1[%c0, %c0_0] : memref<128x128xbf16, #tpu.memory_space<vmem>>, vector<128x128xbf16>
    %c0_1 = arith.constant 0 : index
    %c0_2 = arith.constant 0 : index
    %1 = vector.load %arg2[%c0_1, %c0_2] : memref<128x128xbf16, #tpu.memory_space<vmem>>, vector<128x128xbf16>
    %cst = arith.constant dense<0.000000e+00> : vector<128x128xf32>
    %2 = tpu.matmul %0, %1, %cst {dimension_numbers = #tpu.dot_dimension_numbers<[1], [0], [0], [1], [0, 0, 1, 1], [], []>} : vector<128x128xbf16>, vector<128x128xbf16>, vector<128x128xf32> -> vector<128x128xf32>
    %3 = arith.truncf %2 : vector<128x128xf32> to vector<128x128xbf16>
    %c0_3 = arith.constant 0 : index
    %c0_4 = arith.constant 0 : index
    %4 = vector.load %arg3[%c0_3, %c0_4] : memref<128x128xbf16, #tpu.memory_space<vmem>>, vector<128x128xbf16>
    tpu.vector_store %arg3[%c0_3, %c0_4], %3 {strides = array<i32>} : memref<128x128xbf16, #tpu.memory_space<vmem>>, vector<128x128xbf16>,
    return
  }
  func.func @transform_0(%arg0: i32) -> (i32, i32) {
    %c0_i32 = arith.constant 0 : i32
    %c0_i32_0 = arith.constant 0 : i32
    return %arg0, %c0_i32 : i32, i32
  }
  func.func @transform_1(%arg0: i32) -> (i32, i32) {
    %c0_i32 = arith.constant 0 : i32
    %c0_i32_0 = arith.constant 0 : i32
    %c0_i32_1 = arith.constant 0 : i32
    return %c0_i32, %c0_i32_0 : i32, i32
  }
  func.func @transform_2(%arg0: i32) -> (i32, i32) {
    %c0_i32 = arith.constant 0 : i32
    %c0_i32_0 = arith.constant 0 : i32
    return %arg0, %c0_i32 : i32, i32
  }
}

module attributes {stable_mosaic.version = 11 : i64} {
  func.func @_xw_kernel(%arg0: i32, %arg1: memref<128x128xbf16, #tpu.memory_space<vmem>>, %arg2: memref<128x128xbf16, #tpu.memory_space<vmem>>, %arg3: memref<128x128xbf16, #tpu.memory_space<vmem>>) attributes {dimension_semantics = [#tpu.dimension_semantics<parallel>], iteration_bounds = array<i64: 1>, scalar_prefetch = 0 : i64, scratch_operands = 0 : i64, tpu.core_type = #tpu.core_type<tc>, window_params = [{transform_indices = @transform_0, window_bounds = array<i64: 128, 128>}, {pipeline_mode = #tpu.pipeline_mode<synchronous>, transform_indices = @transform_1, window_bounds = array<i64: 128, 128>}, {transform_indices = @transform_2, window_bounds = array<i64: 128, 128>}]} {
    %c0 = arith.constant 0 : index
    %c0_0 = arith.constant 0 : index
    %0 = vector.load %arg1[%c0, %c0_0] : memref<128x128xbf16, #tpu.memory_space<vmem>>, vector<128x128xbf16>
    %c0_1 = arith.constant 0 : index
    %c0_2 = arith.constant 0 : index
    %1 = vector.load %arg2[%c0_1, %c0_2] : memref<128x128xbf16, #tpu.memory_space<vmem>>, vector<128x128xbf16>
    %cst = arith.constant dense<0.000000e+00> : vector<128x128xf32>
    %2 = tpu.matmul %0, %1, %cst {dimension_numbers = #tpu.dot_dimension_numbers<[1], [0], [0], [1], [0, 0, 1, 1], [], []>} : vector<128x128xbf16>, vector<128x128xbf16>, vector<128x128xf32> -> vector<128x128xf32>
    %3 = arith.truncf %2 : vector<128x128xf32> to vector<128x128xbf16>
    %c0_3 = arith.constant 0 : index
    %c0_4 = arith.constant 0 : index
    %4 = vector.load %arg3[%c0_3, %c0_4] : memref<128x128xbf16, #tpu.memory_space<vmem>>, vector<128x128xbf16>
    tpu.vector_store %arg3[%c0_3, %c0_4], %3 {strides = array<i32>} : memref<128x128xbf16, #tpu.memory_space<vmem>>, vector<128x128xbf16>,
    return
  }
  func.func @transform_0(%arg0: i32) -> (i32, i32) {
    %c0_i32 = arith.constant 0 : i32
    %c0_i32_0 = arith.constant 0 : i32
    return %arg0, %c0_i32 : i32, i32
  }
  func.func @transform_1(%arg0: i32) -> (i32, i32) {
    %c0_i32 = arith.constant 0 : i32
    %c0_i32_0 = arith.constant 0 : i32
    %c0_i32_1 = arith.constant 0 : i32
    return %c0_i32, %c0_i32_0 : i32, i32
  }
  func.func @transform_2(%arg0: i32) -> (i32, i32) {
    %c0_i32 = arith.constant 0 : i32
    %c0_i32_0 = arith.constant 0 : i32
    return %arg0, %c0_i32 : i32, i32
  }
}

module attributes {stable_mosaic.version = 11 : i64} {
  func.func @_agg_kernel(%arg0: i32, %arg1: i32, %arg2: memref<128x128xbf16, #tpu.memory_space<vmem>>, %arg3: memref<128x128xbf16, #tpu.memory_space<vmem>>, %arg4: memref<1x128xf32, #tpu.memory_space<vmem>>, %arg5: memref<128x128xf32, #tpu.memory_space<vmem>>, %arg6: memref<128x128xf32, #tpu.memory_space<vmem>>) attributes {dimension_semantics = [#tpu.dimension_semantics<parallel>, #tpu.dimension_semantics<arbitrary>], iteration_bounds = array<i64: 1, 1>, scalar_prefetch = 0 : i64, scratch_operands = 1 : i64, tpu.core_type = #tpu.core_type<tc>, window_params = [{transform_indices = @transform_0, window_bounds = array<i64: 128, 128>}, {transform_indices = @transform_1, window_bounds = array<i64: 128, 128>}, {pipeline_mode = #tpu.pipeline_mode<synchronous>, transform_indices = @transform_2, window_bounds = array<i64: 1, 128>}, {transform_indices = @transform_3, window_bounds = array<i64: 128, 128>}]} {
    %c0_i32 = arith.constant 0 : i32
    %0 = arith.cmpi eq, %arg1, %c0_i32 : i32
    %1 = arith.extui %0 : i1 to i32
    %c0_i32_0 = arith.constant 0 : i32
    %2 = arith.cmpi ne, %1, %c0_i32_0 : i32
    scf.if %2 {
      %cst_10 = arith.constant 0.000000e+00 : f32
      %12 = vector.broadcast %cst_10 : f32 to vector<128x128xf32>
      %c0_11 = arith.constant 0 : index
      %c0_12 = arith.constant 0 : index
      %13 = vector.load %arg6[%c0_11, %c0_12] : memref<128x128xf32, #tpu.memory_space<vmem>>, vector<128x128xf32>
      tpu.vector_store %arg6[%c0_11, %c0_12], %12 {strides = array<i32>} : memref<128x128xf32, #tpu.memory_space<vmem>>, vector<128x128xf32>,
    } else {
    }
    %c0 = arith.constant 0 : index
    %c0_1 = arith.constant 0 : index
    %3 = vector.load %arg6[%c0, %c0_1] : memref<128x128xf32, #tpu.memory_space<vmem>>, vector<128x128xf32>
    %c0_2 = arith.constant 0 : index
    %c0_3 = arith.constant 0 : index
    %4 = vector.load %arg2[%c0_2, %c0_3] : memref<128x128xbf16, #tpu.memory_space<vmem>>, vector<128x128xbf16>
    %c0_4 = arith.constant 0 : index
    %c0_5 = arith.constant 0 : index
    %5 = vector.load %arg3[%c0_4, %c0_5] : memref<128x128xbf16, #tpu.memory_space<vmem>>, vector<128x128xbf16>
    %cst = arith.constant dense<0.000000e+00> : vector<128x128xf32>
    %6 = tpu.matmul %4, %5, %cst {dimension_numbers = #tpu.dot_dimension_numbers<[1], [0], [0], [1], [0, 0, 1, 1], [], []>} : vector<128x128xbf16>, vector<128x128xbf16>, vector<128x128xf32> -> vector<128x128xf32>
    %7 = arith.addf %3, %6 : vector<128x128xf32>
    %c0_6 = arith.constant 0 : index
    %c0_7 = arith.constant 0 : index
    %8 = vector.load %arg6[%c0_6, %c0_7] : memref<128x128xf32, #tpu.memory_space<vmem>>, vector<128x128xf32>
    tpu.vector_store %arg6[%c0_6, %c0_7], %7 {strides = array<i32>} : memref<128x128xf32, #tpu.memory_space<vmem>>, vector<128x128xf32>,
    %c0_i32_8 = arith.constant 0 : i32
    %9 = arith.cmpi eq, %arg1, %c0_i32_8 : i32
    %10 = arith.extui %9 : i1 to i32
    %c0_i32_9 = arith.constant 0 : i32
    %11 = arith.cmpi ne, %10, %c0_i32_9 : i32
    scf.if %11 {
      %c0_10 = arith.constant 0 : index
      %c0_11 = arith.constant 0 : index
      %12 = vector.load %arg6[%c0_10, %c0_11] : memref<128x128xf32, #tpu.memory_space<vmem>>, vector<128x128xf32>
      %c0_12 = arith.constant 0 : index
      %c0_13 = arith.constant 0 : index
      %13 = vector.load %arg4[%c0_12, %c0_13] : memref<1x128xf32, #tpu.memory_space<vmem>>, vector<1x128xf32>
      %14 = vector.broadcast %13 : vector<1x128xf32> to vector<128x128xf32>
      %15 = arith.addf %12, %14 : vector<128x128xf32>
      %c0_14 = arith.constant 0 : index
      %c0_15 = arith.constant 0 : index
      %16 = vector.load %arg5[%c0_14, %c0_15] : memref<128x128xf32, #tpu.memory_space<vmem>>, vector<128x128xf32>
      tpu.vector_store %arg5[%c0_14, %c0_15], %15 {strides = array<i32>} : memref<128x128xf32, #tpu.memory_space<vmem>>, vector<128x128xf32>,
    } else {
    }
    return
  }
  func.func @transform_0(%arg0: i32, %arg1: i32) -> (i32, i32) {
    %c0_i32 = arith.constant 0 : i32
    return %arg0, %arg1 : i32, i32
  }
  func.func @transform_1(%arg0: i32, %arg1: i32) -> (i32, i32) {
    %c0_i32 = arith.constant 0 : i32
    %c0_i32_0 = arith.constant 0 : i32
    return %arg1, %c0_i32 : i32, i32
  }
  func.func @transform_2(%arg0: i32, %arg1: i32) -> (i32, i32) {
    %c0_i32 = arith.constant 0 : i32
    %c0_i32_0 = arith.constant 0 : i32
    %c0_i32_1 = arith.constant 0 : i32
    return %c0_i32, %c0_i32_0 : i32, i32
  }
  func.func @transform_3(%arg0: i32, %arg1: i32) -> (i32, i32) {
    %c0_i32 = arith.constant 0 : i32
    %c0_i32_0 = arith.constant 0 : i32
    return %arg0, %c0_i32 : i32, i32
  }
}

module attributes {stable_mosaic.version = 11 : i64} {
  func.func @_decode_kernel(%arg0: i32, %arg1: memref<8xi32, #tpu.memory_space<smem>>, %arg2: memref<8xi32, #tpu.memory_space<smem>>, %arg3: memref<128x128xf32, #tpu.memory_space<vmem>>, %arg4: memref<256x128xbf16, #tpu.memory_space<vmem>>, %arg5: memref<1x128xf32, #tpu.memory_space<vmem>>, %arg6: memref<128x128xbf16, #tpu.memory_space<vmem>>, %arg7: memref<1x128xf32, #tpu.memory_space<vmem>>, %arg8: memref<8x128xf32, #tpu.memory_space<vmem>>, %arg9: memref<8x256xf32, #tpu.memory_space<vmem>>) attributes {dimension_semantics = [#tpu.dimension_semantics<parallel>], iteration_bounds = array<i64: 1>, scalar_prefetch = 2 : i64, scratch_operands = 1 : i64, tpu.core_type = #tpu.core_type<tc>, window_params = [{pipeline_mode = #tpu.pipeline_mode<synchronous>, transform_indices = @transform_0, window_bounds = array<i64: 128, 128>}, {pipeline_mode = #tpu.pipeline_mode<synchronous>, transform_indices = @transform_1, window_bounds = array<i64: 256, 128>}, {pipeline_mode = #tpu.pipeline_mode<synchronous>, transform_indices = @transform_2, window_bounds = array<i64: 1, 128>}, {pipeline_mode = #tpu.pipeline_mode<synchronous>, transform_indices = @transform_3, window_bounds = array<i64: 128, 128>}, {pipeline_mode = #tpu.pipeline_mode<synchronous>, transform_indices = @transform_4, window_bounds = array<i64: 1, 128>}, {transform_indices = @transform_5, window_bounds = array<i64: 8, 128>}]} {
    %c8_i32 = arith.constant 8 : i32
    %0 = arith.muli %arg0, %c8_i32 : i32
    %c0_i32 = arith.constant 0 : i32
    %1 = arith.addi %0, %c0_i32 : i32
    %2 = arith.index_cast %1 : i32 to index
    %3 = memref.load %arg1[%2] : memref<8xi32, #tpu.memory_space<smem>>
    %4 = arith.index_cast %3 : i32 to index
    %c0 = arith.constant 0 : index
    %5 = vector.load %arg3[%4, %c0] : memref<128x128xf32, #tpu.memory_space<vmem>>, vector<1x128xf32>
    %6 = arith.index_cast %c0_i32 : i32 to index
    %c0_0 = arith.constant 0 : index
    %7 = vector.load %arg9[%6, %c0_0] : memref<8x256xf32, #tpu.memory_space<vmem>>, vector<1x128xf32>
    tpu.vector_store %arg9[%6, %c0_0], %5 {strides = array<i32>} : memref<8x256xf32, #tpu.memory_space<vmem>>, vector<1x128xf32>,
    %8 = arith.index_cast %1 : i32 to index
    %9 = memref.load %arg2[%8] : memref<8xi32, #tpu.memory_space<smem>>
    %10 = arith.index_cast %9 : i32 to index
    %c0_1 = arith.constant 0 : index
    %11 = vector.load %arg3[%10, %c0_1] : memref<128x128xf32, #tpu.memory_space<vmem>>, vector<1x128xf32>
    %12 = arith.index_cast %c0_i32 : i32 to index
    %c128 = arith.constant 128 : index
    %13 = vector.load %arg9[%12, %c128] : memref<8x256xf32, #tpu.memory_space<vmem>>, vector<1x128xf32>
    tpu.vector_store %arg9[%12, %c128], %11 {strides = array<i32>} : memref<8x256xf32, #tpu.memory_space<vmem>>, vector<1x128xf32>,
    %c1_i32 = arith.constant 1 : i32
    %14 = arith.addi %0, %c1_i32 : i32
    %15 = arith.index_cast %14 : i32 to index
    %16 = memref.load %arg1[%15] : memref<8xi32, #tpu.memory_space<smem>>
    %17 = arith.index_cast %16 : i32 to index
    %c0_2 = arith.constant 0 : index
    %18 = vector.load %arg3[%17, %c0_2] : memref<128x128xf32, #tpu.memory_space<vmem>>, vector<1x128xf32>
    %19 = arith.index_cast %c1_i32 : i32 to index
    %c0_3 = arith.constant 0 : index
    %20 = vector.load %arg9[%19, %c0_3] : memref<8x256xf32, #tpu.memory_space<vmem>>, vector<1x128xf32>
    tpu.vector_store %arg9[%19, %c0_3], %18 {strides = array<i32>} : memref<8x256xf32, #tpu.memory_space<vmem>>, vector<1x128xf32>,
    %21 = arith.index_cast %14 : i32 to index
    %22 = memref.load %arg2[%21] : memref<8xi32, #tpu.memory_space<smem>>
    %23 = arith.index_cast %22 : i32 to index
    %c0_4 = arith.constant 0 : index
    %24 = vector.load %arg3[%23, %c0_4] : memref<128x128xf32, #tpu.memory_space<vmem>>, vector<1x128xf32>
    %25 = arith.index_cast %c1_i32 : i32 to index
    %c128_5 = arith.constant 128 : index
    %26 = vector.load %arg9[%25, %c128_5] : memref<8x256xf32, #tpu.memory_space<vmem>>, vector<1x128xf32>
    tpu.vector_store %arg9[%25, %c128_5], %24 {strides = array<i32>} : memref<8x256xf32, #tpu.memory_space<vmem>>, vector<1x128xf32>,
    %c2_i32 = arith.constant 2 : i32
    %27 = arith.addi %0, %c2_i32 : i32
    %28 = arith.index_cast %27 : i32 to index
    %29 = memref.load %arg1[%28] : memref<8xi32, #tpu.memory_space<smem>>
    %30 = arith.index_cast %29 : i32 to index
    %c0_6 = arith.constant 0 : index
    %31 = vector.load %arg3[%30, %c0_6] : memref<128x128xf32, #tpu.memory_space<vmem>>, vector<1x128xf32>
    %32 = arith.index_cast %c2_i32 : i32 to index
    %c0_7 = arith.constant 0 : index
    %33 = vector.load %arg9[%32, %c0_7] : memref<8x256xf32, #tpu.memory_space<vmem>>, vector<1x128xf32>
    tpu.vector_store %arg9[%32, %c0_7], %31 {strides = array<i32>} : memref<8x256xf32, #tpu.memory_space<vmem>>, vector<1x128xf32>,
    %34 = arith.index_cast %27 : i32 to index
    %35 = memref.load %arg2[%34] : memref<8xi32, #tpu.memory_space<smem>>
    %36 = arith.index_cast %35 : i32 to index
    %c0_8 = arith.constant 0 : index
    %37 = vector.load %arg3[%36, %c0_8] : memref<128x128xf32, #tpu.memory_space<vmem>>, vector<1x128xf32>
    %38 = arith.index_cast %c2_i32 : i32 to index
    %c128_9 = arith.constant 128 : index
    %39 = vector.load %arg9[%38, %c128_9] : memref<8x256xf32, #tpu.memory_space<vmem>>, vector<1x128xf32>
    tpu.vector_store %arg9[%38, %c128_9], %37 {strides = array<i32>} : memref<8x256xf32, #tpu.memory_space<vmem>>, vector<1x128xf32>,
    %c3_i32 = arith.constant 3 : i32
    %40 = arith.addi %0, %c3_i32 : i32
    %41 = arith.index_cast %40 : i32 to index
    %42 = memref.load %arg1[%41] : memref<8xi32, #tpu.memory_space<smem>>
    %43 = arith.index_cast %42 : i32 to index
    %c0_10 = arith.constant 0 : index
    %44 = vector.load %arg3[%43, %c0_10] : memref<128x128xf32, #tpu.memory_space<vmem>>, vector<1x128xf32>
    %45 = arith.index_cast %c3_i32 : i32 to index
    %c0_11 = arith.constant 0 : index
    %46 = vector.load %arg9[%45, %c0_11] : memref<8x256xf32, #tpu.memory_space<vmem>>, vector<1x128xf32>
    tpu.vector_store %arg9[%45, %c0_11], %44 {strides = array<i32>} : memref<8x256xf32, #tpu.memory_space<vmem>>, vector<1x128xf32>,
    %47 = arith.index_cast %40 : i32 to index
    %48 = memref.load %arg2[%47] : memref<8xi32, #tpu.memory_space<smem>>
    %49 = arith.index_cast %48 : i32 to index
    %c0_12 = arith.constant 0 : index
    %50 = vector.load %arg3[%49, %c0_12] : memref<128x128xf32, #tpu.memory_space<vmem>>, vector<1x128xf32>
    %51 = arith.index_cast %c3_i32 : i32 to index
    %c128_13 = arith.constant 128 : index
    %52 = vector.load %arg9[%51, %c128_13] : memref<8x256xf32, #tpu.memory_space<vmem>>, vector<1x128xf32>
    tpu.vector_store %arg9[%51, %c128_13], %50 {strides = array<i32>} : memref<8x256xf32, #tpu.memory_space<vmem>>, vector<1x128xf32>,
    %c4_i32 = arith.constant 4 : i32
    %53 = arith.addi %0, %c4_i32 : i32
    %54 = arith.index_cast %53 : i32 to index
    %55 = memref.load %arg1[%54] : memref<8xi32, #tpu.memory_space<smem>>
    %56 = arith.index_cast %55 : i32 to index
    %c0_14 = arith.constant 0 : index
    %57 = vector.load %arg3[%56, %c0_14] : memref<128x128xf32, #tpu.memory_space<vmem>>, vector<1x128xf32>
    %58 = arith.index_cast %c4_i32 : i32 to index
    %c0_15 = arith.constant 0 : index
    %59 = vector.load %arg9[%58, %c0_15] : memref<8x256xf32, #tpu.memory_space<vmem>>, vector<1x128xf32>
    tpu.vector_store %arg9[%58, %c0_15], %57 {strides = array<i32>} : memref<8x256xf32, #tpu.memory_space<vmem>>, vector<1x128xf32>,
    %60 = arith.index_cast %53 : i32 to index
    %61 = memref.load %arg2[%60] : memref<8xi32, #tpu.memory_space<smem>>
    %62 = arith.index_cast %61 : i32 to index
    %c0_16 = arith.constant 0 : index
    %63 = vector.load %arg3[%62, %c0_16] : memref<128x128xf32, #tpu.memory_space<vmem>>, vector<1x128xf32>
    %64 = arith.index_cast %c4_i32 : i32 to index
    %c128_17 = arith.constant 128 : index
    %65 = vector.load %arg9[%64, %c128_17] : memref<8x256xf32, #tpu.memory_space<vmem>>, vector<1x128xf32>
    tpu.vector_store %arg9[%64, %c128_17], %63 {strides = array<i32>} : memref<8x256xf32, #tpu.memory_space<vmem>>, vector<1x128xf32>,
    %c5_i32 = arith.constant 5 : i32
    %66 = arith.addi %0, %c5_i32 : i32
    %67 = arith.index_cast %66 : i32 to index
    %68 = memref.load %arg1[%67] : memref<8xi32, #tpu.memory_space<smem>>
    %69 = arith.index_cast %68 : i32 to index
    %c0_18 = arith.constant 0 : index
    %70 = vector.load %arg3[%69, %c0_18] : memref<128x128xf32, #tpu.memory_space<vmem>>, vector<1x128xf32>
    %71 = arith.index_cast %c5_i32 : i32 to index
    %c0_19 = arith.constant 0 : index
    %72 = vector.load %arg9[%71, %c0_19] : memref<8x256xf32, #tpu.memory_space<vmem>>, vector<1x128xf32>
    tpu.vector_store %arg9[%71, %c0_19], %70 {strides = array<i32>} : memref<8x256xf32, #tpu.memory_space<vmem>>, vector<1x128xf32>,
    %73 = arith.index_cast %66 : i32 to index
    %74 = memref.load %arg2[%73] : memref<8xi32, #tpu.memory_space<smem>>
    %75 = arith.index_cast %74 : i32 to index
    %c0_20 = arith.constant 0 : index
    %76 = vector.load %arg3[%75, %c0_20] : memref<128x128xf32, #tpu.memory_space<vmem>>, vector<1x128xf32>
    %77 = arith.index_cast %c5_i32 : i32 to index
    %c128_21 = arith.constant 128 : index
    %78 = vector.load %arg9[%77, %c128_21] : memref<8x256xf32, #tpu.memory_space<vmem>>, vector<1x128xf32>
    tpu.vector_store %arg9[%77, %c128_21], %76 {strides = array<i32>} : memref<8x256xf32, #tpu.memory_space<vmem>>, vector<1x128xf32>,
    %c6_i32 = arith.constant 6 : i32
    %79 = arith.addi %0, %c6_i32 : i32
    %80 = arith.index_cast %79 : i32 to index
    %81 = memref.load %arg1[%80] : memref<8xi32, #tpu.memory_space<smem>>
    %82 = arith.index_cast %81 : i32 to index
    %c0_22 = arith.constant 0 : index
    %83 = vector.load %arg3[%82, %c0_22] : memref<128x128xf32, #tpu.memory_space<vmem>>, vector<1x128xf32>
    %84 = arith.index_cast %c6_i32 : i32 to index
    %c0_23 = arith.constant 0 : index
    %85 = vector.load %arg9[%84, %c0_23] : memref<8x256xf32, #tpu.memory_space<vmem>>, vector<1x128xf32>
    tpu.vector_store %arg9[%84, %c0_23], %83 {strides = array<i32>} : memref<8x256xf32, #tpu.memory_space<vmem>>, vector<1x128xf32>,
    %86 = arith.index_cast %79 : i32 to index
    %87 = memref.load %arg2[%86] : memref<8xi32, #tpu.memory_space<smem>>
    %88 = arith.index_cast %87 : i32 to index
    %c0_24 = arith.constant 0 : index
    %89 = vector.load %arg3[%88, %c0_24] : memref<128x128xf32, #tpu.memory_space<vmem>>, vector<1x128xf32>
    %90 = arith.index_cast %c6_i32 : i32 to index
    %c128_25 = arith.constant 128 : index
    %91 = vector.load %arg9[%90, %c128_25] : memref<8x256xf32, #tpu.memory_space<vmem>>, vector<1x128xf32>
    tpu.vector_store %arg9[%90, %c128_25], %89 {strides = array<i32>} : memref<8x256xf32, #tpu.memory_space<vmem>>, vector<1x128xf32>,
    %c7_i32 = arith.constant 7 : i32
    %92 = arith.addi %0, %c7_i32 : i32
    %93 = arith.index_cast %92 : i32 to index
    %94 = memref.load %arg1[%93] : memref<8xi32, #tpu.memory_space<smem>>
    %95 = arith.index_cast %94 : i32 to index
    %c0_26 = arith.constant 0 : index
    %96 = vector.load %arg3[%95, %c0_26] : memref<128x128xf32, #tpu.memory_space<vmem>>, vector<1x128xf32>
    %97 = arith.index_cast %c7_i32 : i32 to index
    %c0_27 = arith.constant 0 : index
    %98 = vector.load %arg9[%97, %c0_27] : memref<8x256xf32, #tpu.memory_space<vmem>>, vector<1x128xf32>
    tpu.vector_store %arg9[%97, %c0_27], %96 {strides = array<i32>} : memref<8x256xf32, #tpu.memory_space<vmem>>, vector<1x128xf32>,
    %99 = arith.index_cast %92 : i32 to index
    %100 = memref.load %arg2[%99] : memref<8xi32, #tpu.memory_space<smem>>
    %101 = arith.index_cast %100 : i32 to index
    %c0_28 = arith.constant 0 : index
    %102 = vector.load %arg3[%101, %c0_28] : memref<128x128xf32, #tpu.memory_space<vmem>>, vector<1x128xf32>
    %103 = arith.index_cast %c7_i32 : i32 to index
    %c128_29 = arith.constant 128 : index
    %104 = vector.load %arg9[%103, %c128_29] : memref<8x256xf32, #tpu.memory_space<vmem>>, vector<1x128xf32>
    tpu.vector_store %arg9[%103, %c128_29], %102 {strides = array<i32>} : memref<8x256xf32, #tpu.memory_space<vmem>>, vector<1x128xf32>,
    %c8_i32_30 = arith.constant 8 : i32
    %c0_31 = arith.constant 0 : index
    %c0_32 = arith.constant 0 : index
    %105 = vector.load %arg9[%c0_31, %c0_32] : memref<8x256xf32, #tpu.memory_space<vmem>>, vector<8x256xf32>
    %106 = arith.truncf %105 : vector<8x256xf32> to vector<8x256xbf16>
    %c0_33 = arith.constant 0 : index
    %c0_34 = arith.constant 0 : index
    %107 = vector.load %arg4[%c0_33, %c0_34] : memref<256x128xbf16, #tpu.memory_space<vmem>>, vector<256x128xbf16>
    %cst = arith.constant dense<0.000000e+00> : vector<8x128xf32>
    %108 = tpu.matmul %106, %107, %cst {dimension_numbers = #tpu.dot_dimension_numbers<[1], [0], [0], [1], [0, 0, 1, 1], [], []>} : vector<8x256xbf16>, vector<256x128xbf16>, vector<8x128xf32> -> vector<8x128xf32>
    %c0_35 = arith.constant 0 : index
    %c0_36 = arith.constant 0 : index
    %109 = vector.load %arg5[%c0_35, %c0_36] : memref<1x128xf32, #tpu.memory_space<vmem>>, vector<1x128xf32>
    %110 = vector.broadcast %109 : vector<1x128xf32> to vector<8x128xf32>
    %111 = arith.addf %108, %110 : vector<8x128xf32>
    %cst_37 = arith.constant 0.000000e+00 : f32
    %112 = vector.broadcast %cst_37 : f32 to vector<8x128xf32>
    %113 = arith.maximumf %111, %112 : vector<8x128xf32>
    %114 = arith.truncf %113 : vector<8x128xf32> to vector<8x128xbf16>
    %c0_38 = arith.constant 0 : index
    %c0_39 = arith.constant 0 : index
    %115 = vector.load %arg6[%c0_38, %c0_39] : memref<128x128xbf16, #tpu.memory_space<vmem>>, vector<128x128xbf16>
    %cst_40 = arith.constant dense<0.000000e+00> : vector<8x128xf32>
    %116 = tpu.matmul %114, %115, %cst_40 {dimension_numbers = #tpu.dot_dimension_numbers<[1], [0], [0], [1], [0, 0, 1, 1], [], []>} : vector<8x128xbf16>, vector<128x128xbf16>, vector<8x128xf32> -> vector<8x128xf32>
    %c0_41 = arith.constant 0 : index
    %c0_42 = arith.constant 0 : index
    %117 = vector.load %arg7[%c0_41, %c0_42] : memref<1x128xf32, #tpu.memory_space<vmem>>, vector<1x128xf32>
    %118 = vector.broadcast %117 : vector<1x128xf32> to vector<8x128xf32>
    %119 = arith.addf %116, %118 : vector<8x128xf32>
    %c0_43 = arith.constant 0 : index
    %c0_44 = arith.constant 0 : index
    %120 = vector.load %arg8[%c0_43, %c0_44] : memref<8x128xf32, #tpu.memory_space<vmem>>, vector<8x128xf32>
    tpu.vector_store %arg8[%c0_43, %c0_44], %119 {strides = array<i32>} : memref<8x128xf32, #tpu.memory_space<vmem>>, vector<8x128xf32>,
    return
  }
  func.func @transform_0(%arg0: i32, %arg1: memref<8xi32, #tpu.memory_space<smem>>, %arg2: memref<8xi32, #tpu.memory_space<smem>>) -> (i32, i32) {
    %c0_i32 = arith.constant 0 : i32
    %c0_i32_0 = arith.constant 0 : i32
    %c0_i32_1 = arith.constant 0 : i32
    return %c0_i32, %c0_i32_0 : i32, i32
  }
  func.func @transform_1(%arg0: i32, %arg1: memref<8xi32, #tpu.memory_space<smem>>, %arg2: memref<8xi32, #tpu.memory_space<smem>>) -> (i32, i32) {
    %c0_i32 = arith.constant 0 : i32
    %c0_i32_0 = arith.constant 0 : i32
    %c0_i32_1 = arith.constant 0 : i32
    return %c0_i32, %c0_i32_0 : i32, i32
  }
  func.func @transform_2(%arg0: i32, %arg1: memref<8xi32, #tpu.memory_space<smem>>, %arg2: memref<8xi32, #tpu.memory_space<smem>>) -> (i32, i32) {
    %c0_i32 = arith.constant 0 : i32
    %c0_i32_0 = arith.constant 0 : i32
    %c0_i32_1 = arith.constant 0 : i32
    return %c0_i32, %c0_i32_0 : i32, i32
  }
  func.func @transform_3(%arg0: i32, %arg1: memref<8xi32, #tpu.memory_space<smem>>, %arg2: memref<8xi32, #tpu.memory_space<smem>>) -> (i32, i32) {
    %c0_i32 = arith.constant 0 : i32
    %c0_i32_0 = arith.constant 0 : i32
    %c0_i32_1 = arith.constant 0 : i32
    return %c0_i32, %c0_i32_0 : i32, i32
  }
  func.func @transform_4(%arg0: i32, %arg1: memref<8xi32, #tpu.memory_space<smem>>, %arg2: memref<8xi32, #tpu.memory_space<smem>>) -> (i32, i32) {
    %c0_i32 = arith.constant 0 : i32
    %c0_i32_0 = arith.constant 0 : i32
    %c0_i32_1 = arith.constant 0 : i32
    return %c0_i32, %c0_i32_0 : i32, i32
  }
  func.func @transform_5(%arg0: i32, %arg1: memref<8xi32, #tpu.memory_space<smem>>, %arg2: memref<8xi32, #tpu.memory_space<smem>>) -> (i32, i32) {
    %c0_i32 = arith.constant 0 : i32
    %c0_i32_0 = arith.constant 0 : i32
    return %arg0, %c0_i32 : i32, i32
  }
}

</mosaic_0001>

<llo_original>
// kernel: gnn_forward.8
$region0: #{gnn_forward.8}
  #allocation0 [shape = 'u32[]', space=smem, size = 0x4, offset = 0x4, fixed_abs, tag = 'smem constant byte address 0x4 - core index']
  #allocation1 [shape = 'u32[144,128]{1,0:T(1,128)}', space=vmem, size = 0x12000, scoped, tag = 'internal scratch']
  #allocation2 [shape = 'f32[128,128]{1,0:T(8,128)}', space=vmem, size = 0x10000, scoped, tag = 'scratch operand']
  %s0 = inlined_call_operand.vmem [shape: bf16[128,128], index: 0, kind: input, shape index: {}]
  %s1 = inlined_call_operand.vmem [shape: bf16[128,128], index: 1, kind: input, shape index: {}]
  %s2 = inlined_call_operand.vmem [shape: f32[1,128], index: 2, kind: input, shape index: {}]
  %s3 = inlined_call_operand.vmem [shape: f32[128,128], index: 3, kind: output, shape index: {}]
  %s4 = sld [smem:[#allocation0]]
  $region30: #{gnn_forward.8} parent=0
    _
  %s6 = ssub.s32 1, %s4
  %s7 = scalar_select 0, %s6, %s4
  // Predicated region
  $region2: #{gnn_forward.8} parent=0 // pred_check
    _
  $region3: #{gnn_forward.8} parent=0 // pred_check_branch
    %9 = sbr.rel (0) target = $region5
  $region4: #{gnn_forward.8} parent=0 // pred_region
    _
  $region5: #{gnn_forward.8} parent=0 // pred_fallthru
    _
  // Predicated region
  $region6: #{gnn_forward.8} parent=0 // pred_check
    _
  $region7: #{gnn_forward.8} parent=0 // pred_check_branch
    %11 = sbr.rel (0) target = $region9
  $region8: #{gnn_forward.8} parent=0 // pred_region
    _
  $region9: #{gnn_forward.8} parent=0 // pred_fallthru
    _
  // Predicated region
  $region10: #{gnn_forward.8} parent=0 // pred_check
    _
  $region11: #{gnn_forward.8} parent=0 // pred_check_branch
    %13 = sbr.rel (0) target = $region13
  $region12: #{gnn_forward.8} parent=0 // pred_region
    _
  $region13: #{gnn_forward.8} parent=0 // pred_fallthru
    _
  %p15 = scmp.eq.s32.totalorder 0, 0
  // Predicated region
  $region14: #{gnn_forward.8} parent=0 // pred_check
    %p16 = pneg %p15
  $region15: #{gnn_forward.8} parent=0 // pred_check_branch
    %18 = sbr.rel (%p16) target = $region17
  $region16: #{gnn_forward.8} parent=0 // pred_region
    %19 = vst [vmem:[#allocation2] sm:$0xff] 0.0
    %20 = vst [vmem:[#allocation2 + $0x8] sm:$0xff] 0.0
    %21 = vst [vmem:[#allocation2 + $0x10] sm:$0xff] 0.0
    %22 = vst [vmem:[#allocation2 + $0x18] sm:$0xff] 0.0
    %23 = vst [vmem:[#allocation2 + $0x20] sm:$0xff] 0.0
    %24 = vst [vmem:[#allocation2 + $0x28] sm:$0xff] 0.0
    %25 = vst [vmem:[#allocation2 + $0x30] sm:$0xff] 0.0
    %26 = vst [vmem:[#allocation2 + $0x38] sm:$0xff] 0.0
    %27 = vst [vmem:[#allocation2 + $0x40] sm:$0xff] 0.0
    %28 = vst [vmem:[#allocation2 + $0x48] sm:$0xff] 0.0
    %29 = vst [vmem:[#allocation2 + $0x50] sm:$0xff] 0.0
    %30 = vst [vmem:[#allocation2 + $0x58] sm:$0xff] 0.0
    %31 = vst [vmem:[#allocation2 + $0x60] sm:$0xff] 0.0
    %32 = vst [vmem:[#allocation2 + $0x68] sm:$0xff] 0.0
    %33 = vst [vmem:[#allocation2 + $0x70] sm:$0xff] 0.0
    %34 = vst [vmem:[#allocation2 + $0x78] sm:$0xff] 0.0
  $region17: #{gnn_forward.8} parent=0 // pred_fallthru
    _
  %v35 = vld [vmem:[#allocation2] sm:$0xff]
  %v36 = vld [vmem:[#allocation2 + $0x8] sm:$0xff]
  %v37 = vld [vmem:[#allocation2 + $0x10] sm:$0xff]
  %v38 = vld [vmem:[#allocation2 + $0x18] sm:$0xff]
  %v39 = vld [vmem:[#allocation2 + $0x20] sm:$0xff]
  %v40 = vld [vmem:[#allocation2 + $0x28] sm:$0xff]
  %v41 = vld [vmem:[#allocation2 + $0x30] sm:$0xff]
  %v42 = vld [vmem:[#allocation2 + $0x38] sm:$0xff]
  %v43 = vld [vmem:[#allocation2 + $0x40] sm:$0xff]
  %v44 = vld [vmem:[#allocation2 + $0x48] sm:$0xff]
  %v45 = vld [vmem:[#allocation2 + $0x50] sm:$0xff]
  %v46 = vld [vmem:[#allocation2 + $0x58] sm:$0xff]
  %v47 = vld [vmem:[#allocation2 + $0x60] sm:$0xff]
  %v48 = vld [vmem:[#allocation2 + $0x68] sm:$0xff]
  %v49 = vld [vmem:[#allocation2 + $0x70] sm:$0xff]
  %v50 = vld [vmem:[#allocation2 + $0x78] sm:$0xff]
  %v51 = vld [vmem:[%s0] sm:$0xf]
  %v52 = vld [vmem:[%s0 + $0x4] sm:$0xf]
  %v53 = vld [vmem:[%s0 + $0x8] sm:$0xf]
  %v54 = vld [vmem:[%s0 + $0xc] sm:$0xf]
  %v55 = vld [vmem:[%s0 + $0x10] sm:$0xf]
  %v56 = vld [vmem:[%s0 + $0x14] sm:$0xf]
  %v57 = vld [vmem:[%s0 + $0x18] sm:$0xf]
  %v58 = vld [vmem:[%s0 + $0x1c] sm:$0xf]
  %v59 = vld [vmem:[%s0 + $0x20] sm:$0xf]
  %v60 = vld [vmem:[%s0 + $0x24] sm:$0xf]
  %v61 = vld [vmem:[%s0 + $0x28] sm:$0xf]
  %v62 = vld [vmem:[%s0 + $0x2c] sm:$0xf]
  %v63 = vld [vmem:[%s0 + $0x30] sm:$0xf]
  %v64 = vld [vmem:[%s0 + $0x34] sm:$0xf]
  %v65 = vld [vmem:[%s0 + $0x38] sm:$0xf]
  %v66 = vld [vmem:[%s0 + $0x3c] sm:$0xf]
  %v67 = vld [vmem:[%s1] sm:$0xf]
  %v68 = vld [vmem:[%s1 + $0x4] sm:$0xf]
  %v69 = vld [vmem:[%s1 + $0x8] sm:$0xf]
  %v70 = vld [vmem:[%s1 + $0xc] sm:$0xf]
  %v71 = vld [vmem:[%s1 + $0x10] sm:$0xf]
  %v72 = vld [vmem:[%s1 + $0x14] sm:$0xf]
  %v73 = vld [vmem:[%s1 + $0x18] sm:$0xf]
  %v74 = vld [vmem:[%s1 + $0x1c] sm:$0xf]
  %v75 = vld [vmem:[%s1 + $0x20] sm:$0xf]
  %v76 = vld [vmem:[%s1 + $0x24] sm:$0xf]
  %v77 = vld [vmem:[%s1 + $0x28] sm:$0xf]
  %v78 = vld [vmem:[%s1 + $0x2c] sm:$0xf]
  %v79 = vld [vmem:[%s1 + $0x30] sm:$0xf]
  %v80 = vld [vmem:[%s1 + $0x34] sm:$0xf]
  %v81 = vld [vmem:[%s1 + $0x38] sm:$0xf]
  %v82 = vld [vmem:[%s1 + $0x3c] sm:$0xf]
  %v99 = vunpack.c.l.b16 %v51
  %v100 = vunpack.c.l.b16 %v52
  %v101 = vunpack.c.l.b16 %v53
  %v102 = vunpack.c.l.b16 %v54
  %v103 = vunpack.c.l.b16 %v55
  %v104 = vunpack.c.l.b16 %v56
  %v105 = vunpack.c.l.b16 %v57
  %v106 = vunpack.c.l.b16 %v58
  %v107 = vunpack.c.l.b16 %v59
  %v108 = vunpack.c.l.b16 %v60
  %v109 = vunpack.c.l.b16 %v61
  %v110 = vunpack.c.l.b16 %v62
  %v111 = vunpack.c.l.b16 %v63
  %v112 = vunpack.c.l.b16 %v64
  %v113 = vunpack.c.l.b16 %v65
  %v114 = vunpack.c.l.b16 %v66
  %v115 = vpack.c.b16 %v100, %v99
  %v116 = vpack.c.b16 %v102, %v101
  %v117 = vpack.c.b16 %v104, %v103
  %v118 = vpack.c.b16 %v106, %v105
  %v119 = vpack.c.b16 %v108, %v107
  %v120 = vpack.c.b16 %v110, %v109
  %v121 = vpack.c.b16 %v112, %v111
  %v122 = vpack.c.b16 %v114, %v113
  %v147 = vunpack.c.l.b16 %v67
  %v148 = vunpack.c.l.b16 %v68
  %v149 = vunpack.c.l.b16 %v69
  %v150 = vunpack.c.l.b16 %v70
  %v151 = vunpack.c.l.b16 %v71
  %v152 = vunpack.c.l.b16 %v72
  %v153 = vunpack.c.l.b16 %v73
  %v154 = vunpack.c.l.b16 %v74
  %v155 = vunpack.c.l.b16 %v75
  %v156 = vunpack.c.l.b16 %v76
  %v157 = vunpack.c.l.b16 %v77
  %v158 = vunpack.c.l.b16 %v78
  %v159 = vunpack.c.l.b16 %v79
  %v160 = vunpack.c.l.b16 %v80
  %v161 = vunpack.c.l.b16 %v81
  %v162 = vunpack.c.l.b16 %v82
  %v163 = vpack.c.b16 %v148, %v147
  %v164 = vpack.c.b16 %v150, %v149
  %v165 = vpack.c.b16 %v152, %v151
  %v166 = vpack.c.b16 %v154, %v153
  %v167 = vpack.c.b16 %v156, %v155
  %v168 = vpack.c.b16 %v158, %v157
  %v169 = vpack.c.b16 %v160, %v159
  %v170 = vpack.c.b16 %v162, %v161
  %179 = vmatprep.subr.bf16.mxu0 0
  %180 = vmatpush1.bf16.msra.mxu0 %v170
  %181 = vmatprep.subr.bf16.mxu0 0
  %182 = vmatpush1.bf16.msra.mxu0 %v169
  %183 = vmatprep.subr.bf16.mxu0 0
  %184 = vmatpush1.bf16.msra.mxu0 %v168
  %185 = vmatprep.subr.bf16.mxu0 0
  %186 = vmatpush1.bf16.msra.mxu0 %v167
  %187 = vmatprep.subr.bf16.mxu0 0
  %188 = vmatpush1.bf16.msra.mxu0 %v166
  %189 = vmatprep.subr.bf16.mxu0 0
  %190 = vmatpush1.bf16.msra.mxu0 %v165
  %191 = vmatprep.subr.bf16.mxu0 0
  %192 = vmatpush1.bf16.msra.mxu0 %v164
  %193 = vmatprep.subr.bf16.mxu0 0
  %194 = vmatpush1.bf16.msra.mxu0 %v163
  %195 = vmatprep.subr.bf16.mxu0 0
  %196 = vmatpush2.bf16.msra.mxu0 0
  %197 = vmatprep.subr.bf16.mxu0 0
  %198 = vmatpush2.bf16.msra.mxu0 0
  %199 = vmatprep.subr.bf16.mxu0 0
  %200 = vmatpush2.bf16.msra.mxu0 0
  %201 = vmatprep.subr.bf16.mxu0 0
  %202 = vmatpush2.bf16.msra.mxu0 0
  %203 = vmatprep.subr.bf16.mxu0 0
  %204 = vmatpush2.bf16.msra.mxu0 0
  %205 = vmatprep.subr.bf16.mxu0 0
  %206 = vmatpush2.bf16.msra.mxu0 0
  %207 = vmatprep.subr.bf16.mxu0 0
  %208 = vmatpush2.bf16.msra.mxu0 0
  %209 = vmatprep.subr.bf16.mxu0 0
  %210 = vmatpush2.bf16.msra.mxu0 0
  %211 = vmatprep.mubr.bf16.mxu0 0
  %212 = vmatmul.mubr.bf16.gmra.mxu0 %v115
  %v213 = vpop.f32.mrf.mxu0
  %v214 = vadd.f32 0.0, %v213
  %v215 = vpop.f32.mrf.mxu0
  %v216 = vpop.f32.mrf.mxu0
  %v217 = vadd.f32 0.0, %v216
  %v218 = vpop.f32.mrf.mxu0
  %219 = vmatprep.mubr.bf16.mxu0 0
  %220 = vmatmul.mubr.bf16.gmra.mxu0 %v116
  %v221 = vpop.f32.mrf.mxu0
  %v222 = vadd.f32 0.0, %v221
  %v223 = vpop.f32.mrf.mxu0
  %v224 = vpop.f32.mrf.mxu0
  %v225 = vadd.f32 0.0, %v224
  %v226 = vpop.f32.mrf.mxu0
  %227 = vmatprep.mubr.bf16.mxu0 0
  %228 = vmatmul.mubr.bf16.gmra.mxu0 %v117
  %v229 = vpop.f32.mrf.mxu0
  %v230 = vadd.f32 0.0, %v229
  %v231 = vpop.f32.mrf.mxu0
  %v232 = vpop.f32.mrf.mxu0
  %v233 = vadd.f32 0.0, %v232
  %v234 = vpop.f32.mrf.mxu0
  %235 = vmatprep.mubr.bf16.mxu0 0
  %236 = vmatmul.mubr.bf16.gmra.mxu0 %v118
  %v237 = vpop.f32.mrf.mxu0
  %v238 = vadd.f32 0.0, %v237
  %v239 = vpop.f32.mrf.mxu0
  %v240 = vpop.f32.mrf.mxu0
  %v241 = vadd.f32 0.0, %v240
  %v242 = vpop.f32.mrf.mxu0
  %243 = vmatprep.mubr.bf16.mxu0 0
  %244 = vmatmul.mubr.bf16.gmra.mxu0 %v119
  %v245 = vpop.f32.mrf.mxu0
  %v246 = vadd.f32 0.0, %v245
  %v247 = vpop.f32.mrf.mxu0
  %v248 = vpop.f32.mrf.mxu0
  %v249 = vadd.f32 0.0, %v248
  %v250 = vpop.f32.mrf.mxu0
  %251 = vmatprep.mubr.bf16.mxu0 0
  %252 = vmatmul.mubr.bf16.gmra.mxu0 %v120
  %v253 = vpop.f32.mrf.mxu0
  %v254 = vadd.f32 0.0, %v253
  %v255 = vpop.f32.mrf.mxu0
  %v256 = vpop.f32.mrf.mxu0
  %v257 = vadd.f32 0.0, %v256
  %v258 = vpop.f32.mrf.mxu0
  %259 = vmatprep.mubr.bf16.mxu0 0
  %260 = vmatmul.mubr.bf16.gmra.mxu0 %v121
  %v261 = vpop.f32.mrf.mxu0
  %v262 = vadd.f32 0.0, %v261
  %v263 = vpop.f32.mrf.mxu0
  %v264 = vpop.f32.mrf.mxu0
  %v265 = vadd.f32 0.0, %v264
  %v266 = vpop.f32.mrf.mxu0
  %267 = vmatprep.mubr.bf16.mxu0 0
  %268 = vmatmul.mubr.bf16.gmra.mxu0 %v122
  %v269 = vpop.f32.mrf.mxu0
  %v270 = vadd.f32 0.0, %v269
  %v271 = vpop.f32.mrf.mxu0
  %v272 = vpop.f32.mrf.mxu0
  %v273 = vadd.f32 0.0, %v272
  %v274 = vpop.f32.mrf.mxu0
  %275 = vdwg.mxu0
  %v276 = vadd.f32 %v35, %v214
  %v277 = vadd.f32 %v36, %v217
  %v278 = vadd.f32 %v37, %v222
  %v279 = vadd.f32 %v38, %v225
  %v280 = vadd.f32 %v39, %v230
  %v281 = vadd.f32 %v40, %v233
  %v282 = vadd.f32 %v41, %v238
  %v283 = vadd.f32 %v42, %v241
  %v284 = vadd.f32 %v43, %v246
  %v285 = vadd.f32 %v44, %v249
  %v286 = vadd.f32 %v45, %v254
  %v287 = vadd.f32 %v46, %v257
  %v288 = vadd.f32 %v47, %v262
  %v289 = vadd.f32 %v48, %v265
  %v290 = vadd.f32 %v49, %v270
  %v291 = vadd.f32 %v50, %v273
  %292 = vst [vmem:[#allocation2] sm:$0xff] %v276
  %293 = vst [vmem:[#allocation2 + $0x8] sm:$0xff] %v277
  %294 = vst [vmem:[#allocation2 + $0x10] sm:$0xff] %v278
  %295 = vst [vmem:[#allocation2 + $0x18] sm:$0xff] %v279
  %296 = vst [vmem:[#allocation2 + $0x20] sm:$0xff] %v280
  %297 = vst [vmem:[#allocation2 + $0x28] sm:$0xff] %v281
  %298 = vst [vmem:[#allocation2 + $0x30] sm:$0xff] %v282
  %299 = vst [vmem:[#allocation2 + $0x38] sm:$0xff] %v283
  %300 = vst [vmem:[#allocation2 + $0x40] sm:$0xff] %v284
  %301 = vst [vmem:[#allocation2 + $0x48] sm:$0xff] %v285
  %302 = vst [vmem:[#allocation2 + $0x50] sm:$0xff] %v286
  %303 = vst [vmem:[#allocation2 + $0x58] sm:$0xff] %v287
  %304 = vst [vmem:[#allocation2 + $0x60] sm:$0xff] %v288
  %305 = vst [vmem:[#allocation2 + $0x68] sm:$0xff] %v289
  %306 = vst [vmem:[#allocation2 + $0x70] sm:$0xff] %v290
  %307 = vst [vmem:[#allocation2 + $0x78] sm:$0xff] %v291
  // Predicated region
  $region18: #{gnn_forward.8} parent=0 // pred_check
    %p308 = pneg %p15
  $region19: #{gnn_forward.8} parent=0 // pred_check_branch
    %310 = sbr.rel (%p308) target = $region21
  $region20: #{gnn_forward.8} parent=0 // pred_region
    %v311 = vld [vmem:[#allocation2] sm:$0xff]
    %v312 = vld [vmem:[#allocation2 + $0x8] sm:$0xff]
    %v313 = vld [vmem:[#allocation2 + $0x10] sm:$0xff]
    %v314 = vld [vmem:[#allocation2 + $0x18] sm:$0xff]
    %v315 = vld [vmem:[#allocation2 + $0x20] sm:$0xff]
    %v316 = vld [vmem:[#allocation2 + $0x28] sm:$0xff]
    %v317 = vld [vmem:[#allocation2 + $0x30] sm:$0xff]
    %v318 = vld [vmem:[#allocation2 + $0x38] sm:$0xff]
    %v319 = vld [vmem:[#allocation2 + $0x40] sm:$0xff]
    %v320 = vld [vmem:[#allocation2 + $0x48] sm:$0xff]
    %v321 = vld [vmem:[#allocation2 + $0x50] sm:$0xff]
    %v322 = vld [vmem:[#allocation2 + $0x58] sm:$0xff]
    %v323 = vld [vmem:[#allocation2 + $0x60] sm:$0xff]
    %v324 = vld [vmem:[#allocation2 + $0x68] sm:$0xff]
    %v325 = vld [vmem:[#allocation2 + $0x70] sm:$0xff]
    %v326 = vld [vmem:[#allocation2 + $0x78] sm:$0xff]
    %v327 = vld [vmem:[%s2] sm:$0x1]
    %v329 = vlaneseq
    %v330 = vshrl.u32 %v329, 7
    %v331 = vsub.s32 0, %v330
    %v332 = vrot.slane %v327, %v331
    %v334 = vadd.f32 %v311, %v332
    %v335 = vadd.f32 %v312, %v332
    %v336 = vadd.f32 %v313, %v332
    %v337 = vadd.f32 %v314, %v332
    %v338 = vadd.f32 %v315, %v332
    %v339 = vadd.f32 %v316, %v332
    %v340 = vadd.f32 %v317, %v332
    %v341 = vadd.f32 %v318, %v332
    %v342 = vadd.f32 %v319, %v332
    %v343 = vadd.f32 %v320, %v332
    %v344 = vadd.f32 %v321, %v332
    %v345 = vadd.f32 %v322, %v332
    %v346 = vadd.f32 %v323, %v332
    %v347 = vadd.f32 %v324, %v332
    %v348 = vadd.f32 %v325, %v332
    %v349 = vadd.f32 %v326, %v332
    %350 = vst [vmem:[%s3] sm:$0xff] %v334
    %351 = vst [vmem:[%s3 + $0x8] sm:$0xff] %v335
    %352 = vst [vmem:[%s3 + $0x10] sm:$0xff] %v336
    %353 = vst [vmem:[%s3 + $0x18] sm:$0xff] %v337
    %354 = vst [vmem:[%s3 + $0x20] sm:$0xff] %v338
    %355 = vst [vmem:[%s3 + $0x28] sm:$0xff] %v339
    %356 = vst [vmem:[%s3 + $0x30] sm:$0xff] %v340
    %357 = vst [vmem:[%s3 + $0x38] sm:$0xff] %v341
    %358 = vst [vmem:[%s3 + $0x40] sm:$0xff] %v342
    %359 = vst [vmem:[%s3 + $0x48] sm:$0xff] %v343
    %360 = vst [vmem:[%s3 + $0x50] sm:$0xff] %v344
    %361 = vst [vmem:[%s3 + $0x58] sm:$0xff] %v345
    %362 = vst [vmem:[%s3 + $0x60] sm:$0xff] %v346
    %363 = vst [vmem:[%s3 + $0x68] sm:$0xff] %v347
    %364 = vst [vmem:[%s3 + $0x70] sm:$0xff] %v348
    %365 = vst [vmem:[%s3 + $0x78] sm:$0xff] %v349
  $region21: #{gnn_forward.8} parent=0 // pred_fallthru
    _
  // Predicated region
  $region22: #{gnn_forward.8} parent=0 // pred_check
    _
  $region23: #{gnn_forward.8} parent=0 // pred_check_branch
    %367 = sbr.rel (0) target = $region25
  $region24: #{gnn_forward.8} parent=0 // pred_region
    _
  $region25: #{gnn_forward.8} parent=0 // pred_fallthru
    _
  // Predicated region
  $region26: #{gnn_forward.8} parent=0 // pred_check
    _
  $region27: #{gnn_forward.8} parent=0 // pred_check_branch
    %369 = sbr.rel (0) target = $region29
  $region28: #{gnn_forward.8} parent=0 // pred_region
    _
  $region29: #{gnn_forward.8} parent=0 // pred_fallthru
    _

// kernel: gnn_forward.5
$region0: #{gnn_forward.5}
  #allocation0 [shape = 'u32[]', space=smem, size = 0x4, offset = 0x4, fixed_abs, tag = 'smem constant byte address 0x4 - core index']
  #allocation1 [shape = 'u32[144,128]{1,0:T(1,128)}', space=vmem, size = 0x12000, scoped, tag = 'internal scratch']
  %s0 = inlined_call_operand.hbm [shape: bf16[128,128], index: 0, kind: input, shape index: {}]
  %s1 = inlined_call_operand.hbm [shape: bf16[128,128], index: 1, kind: input, shape index: {}]
  %s2 = inlined_call_operand.vmem [shape: bf16[128,128], index: 2, kind: output, shape index: {}]
  %s3 = sld [smem:[#allocation0]]
  $region26: #{gnn_forward.5} parent=0
    _
  %s5 = ssub.s32 1, %s3
  %s6 = scalar_select 0, %s5, %s3
  $region1: #{gnn_forward.5} parent=0
    #allocation2 [shape = 'u8[32768]{0}', space=vmem, size = 0x8000, scoped, tag = 'input window, operand 0, single buffered']
    #allocation3 [shape = 's32[1]{0}', space=sflag, size = 0x4, scoped, tag = 'scoped memory for gnn_forward.5']
    #allocation4 [shape = 'u8[32768]{0}', space=vmem, size = 0x8000, scoped, tag = 'input window, operand 1, single buffered']
    #allocation5 [shape = 's32[1]{0}', space=sflag, size = 0x4, scoped, tag = 'scoped memory for gnn_forward.5']
    %7 = vsyncpa [#allocation3], 0
    %8 = vsyncpa [#allocation5], 0
    // Predicated region
    $region2: #{gnn_forward.5} parent=1 // pred_check
      _
    $region3: #{gnn_forward.5} parent=1 // pred_check_branch
      %10 = sbr.rel (0) target = $region5
    $region4: #{gnn_forward.5} parent=1 // pred_region
      %s12 = ssub.s32 1024, 1024
      %13 = vsyncadd [#allocation3], %s12
      %s14 = sshll.u32 [#allocation2], 4
      %s15 = int_to_ptr.vmem [resolvable:$true] %s14
      %20 = dma.hbm_to_vmem [thread:$0]  %s0, 1024, %s15, [#allocation3], 64, 64, 4
    $region5: #{gnn_forward.5} parent=1 // pred_fallthru
      _
    // Predicated region
    $region6: #{gnn_forward.5} parent=1 // pred_check
      _
    $region7: #{gnn_forward.5} parent=1 // pred_check_branch
      %22 = sbr.rel (0) target = $region9
    $region8: #{gnn_forward.5} parent=1 // pred_region
      %s24 = ssub.s32 1024, 1024
      %25 = vsyncadd [#allocation5], %s24
      %s26 = sshll.u32 [#allocation4], 4
      %s27 = int_to_ptr.vmem [resolvable:$true] %s26
      %32 = dma.hbm_to_vmem [thread:$0]  %s1, 1024, %s27, [#allocation5], 64, 64, 4
    $region9: #{gnn_forward.5} parent=1 // pred_fallthru
      _
    // Predicated region
    $region10: #{gnn_forward.5} parent=1 // pred_check
      _
    $region11: #{gnn_forward.5} parent=1 // pred_check_branch
      %34 = sbr.rel (0) target = $region13
    $region12: #{gnn_forward.5} parent=1 // pred_region
      %35 = dma.done [#allocation3], 1024
    $region13: #{gnn_forward.5} parent=1 // pred_fallthru
      _
    // Predicated region
    $region14: #{gnn_forward.5} parent=1 // pred_check
      _
    $region15: #{gnn_forward.5} parent=1 // pred_check_branch
      %37 = sbr.rel (0) target = $region17
    $region16: #{gnn_forward.5} parent=1 // pred_region
      %38 = dma.done [#allocation5], 1024
    $region17: #{gnn_forward.5} parent=1 // pred_fallthru
      _
    %v40 = vld [vmem:[#allocation2] sm:$0xf]
    %v41 = vld [vmem:[#allocation2 + $0x4] sm:$0xf]
    %v42 = vld [vmem:[#allocation2 + $0x8] sm:$0xf]
    %v43 = vld [vmem:[#allocation2 + $0xc] sm:$0xf]
    %v44 = vld [vmem:[#allocation2 + $0x10] sm:$0xf]
    %v45 = vld [vmem:[#allocation2 + $0x14] sm:$0xf]
    %v46 = vld [vmem:[#allocation2 + $0x18] sm:$0xf]
    %v47 = vld [vmem:[#allocation2 + $0x1c] sm:$0xf]
    %v48 = vld [vmem:[#allocation2 + $0x20] sm:$0xf]
    %v49 = vld [vmem:[#allocation2 + $0x24] sm:$0xf]
    %v50 = vld [vmem:[#allocation2 + $0x28] sm:$0xf]
    %v51 = vld [vmem:[#allocation2 + $0x2c] sm:$0xf]
    %v52 = vld [vmem:[#allocation2 + $0x30] sm:$0xf]
    %v53 = vld [vmem:[#allocation2 + $0x34] sm:$0xf]
    %v54 = vld [vmem:[#allocation2 + $0x38] sm:$0xf]
    %v55 = vld [vmem:[#allocation2 + $0x3c] sm:$0xf]
    %v56 = vld [vmem:[#allocation4] sm:$0xf]
    %v57 = vld [vmem:[#allocation4 + $0x4] sm:$0xf]
    %v58 = vld [vmem:[#allocation4 + $0x8] sm:$0xf]
    %v59 = vld [vmem:[#allocation4 + $0xc] sm:$0xf]
    %v60 = vld [vmem:[#allocation4 + $0x10] sm:$0xf]
    %v61 = vld [vmem:[#allocation4 + $0x14] sm:$0xf]
    %v62 = vld [vmem:[#allocation4 + $0x18] sm:$0xf]
    %v63 = vld [vmem:[#allocation4 + $0x1c] sm:$0xf]
    %v64 = vld [vmem:[#allocation4 + $0x20] sm:$0xf]
    %v65 = vld [vmem:[#allocation4 + $0x24] sm:$0xf]
    %v66 = vld [vmem:[#allocation4 + $0x28] sm:$0xf]
    %v67 = vld [vmem:[#allocation4 + $0x2c] sm:$0xf]
    %v68 = vld [vmem:[#allocation4 + $0x30] sm:$0xf]
    %v69 = vld [vmem:[#allocation4 + $0x34] sm:$0xf]
    %v70 = vld [vmem:[#allocation4 + $0x38] sm:$0xf]
    %v71 = vld [vmem:[#allocation4 + $0x3c] sm:$0xf]
    %v88 = vunpack.c.l.b16 %v40
    %v89 = vunpack.c.l.b16 %v41
    %v90 = vunpack.c.l.b16 %v42
    %v91 = vunpack.c.l.b16 %v43
    %v92 = vunpack.c.l.b16 %v44
    %v93 = vunpack.c.l.b16 %v45
    %v94 = vunpack.c.l.b16 %v46
    %v95 = vunpack.c.l.b16 %v47
    %v96 = vunpack.c.l.b16 %v48
    %v97 = vunpack.c.l.b16 %v49
    %v98 = vunpack.c.l.b16 %v50
    %v99 = vunpack.c.l.b16 %v51
    %v100 = vunpack.c.l.b16 %v52
    %v101 = vunpack.c.l.b16 %v53
    %v102 = vunpack.c.l.b16 %v54
    %v103 = vunpack.c.l.b16 %v55
    %v104 = vpack.c.b16 %v89, %v88
    %v105 = vpack.c.b16 %v91, %v90
    %v106 = vpack.c.b16 %v93, %v92
    %v107 = vpack.c.b16 %v95, %v94
    %v108 = vpack.c.b16 %v97, %v96
    %v109 = vpack.c.b16 %v99, %v98
    %v110 = vpack.c.b16 %v101, %v100
    %v111 = vpack.c.b16 %v103, %v102
    %v136 = vunpack.c.l.b16 %v56
    %v137 = vunpack.c.l.b16 %v57
    %v138 = vunpack.c.l.b16 %v58
    %v139 = vunpack.c.l.b16 %v59
    %v140 = vunpack.c.l.b16 %v60
    %v141 = vunpack.c.l.b16 %v61
    %v142 = vunpack.c.l.b16 %v62
    %v143 = vunpack.c.l.b16 %v63
    %v144 = vunpack.c.l.b16 %v64
    %v145 = vunpack.c.l.b16 %v65
    %v146 = vunpack.c.l.b16 %v66
    %v147 = vunpack.c.l.b16 %v67
    %v148 = vunpack.c.l.b16 %v68
    %v149 = vunpack.c.l.b16 %v69
    %v150 = vunpack.c.l.b16 %v70
    %v151 = vunpack.c.l.b16 %v71
    %v152 = vpack.c.b16 %v137, %v136
    %v153 = vpack.c.b16 %v139, %v138
    %v154 = vpack.c.b16 %v141, %v140
    %v155 = vpack.c.b16 %v143, %v142
    %v156 = vpack.c.b16 %v145, %v144
    %v157 = vpack.c.b16 %v147, %v146
    %v158 = vpack.c.b16 %v149, %v148
    %v159 = vpack.c.b16 %v151, %v150
    %168 = vmatprep.subr.bf16.mxu0 0
    %169 = vmatpush1.bf16.msra.mxu0 %v159
    %170 = vmatprep.subr.bf16.mxu0 0
    %171 = vmatpush1.bf16.msra.mxu0 %v158
    %172 = vmatprep.subr.bf16.mxu0 0
    %173 = vmatpush1.bf16.msra.mxu0 %v157
    %174 = vmatprep.subr.bf16.mxu0 0
    %175 = vmatpush1.bf16.msra.mxu0 %v156
    %176 = vmatprep.subr.bf16.mxu0 0
    %177 = vmatpush1.bf16.msra.mxu0 %v155
    %178 = vmatprep.subr.bf16.mxu0 0
    %179 = vmatpush1.bf16.msra.mxu0 %v154
    %180 = vmatprep.subr.bf16.mxu0 0
    %181 = vmatpush1.bf16.msra.mxu0 %v153
    %182 = vmatprep.subr.bf16.mxu0 0
    %183 = vmatpush1.bf16.msra.mxu0 %v152
    %184 = vmatprep.subr.bf16.mxu0 0
    %185 = vmatpush2.bf16.msra.mxu0 0
    %186 = vmatprep.subr.bf16.mxu0 0
    %187 = vmatpush2.bf16.msra.mxu0 0
    %188 = vmatprep.subr.bf16.mxu0 0
    %189 = vmatpush2.bf16.msra.mxu0 0
    %190 = vmatprep.subr.bf16.mxu0 0
    %191 = vmatpush2.bf16.msra.mxu0 0
    %192 = vmatprep.subr.bf16.mxu0 0
    %193 = vmatpush2.bf16.msra.mxu0 0
    %194 = vmatprep.subr.bf16.mxu0 0
    %195 = vmatpush2.bf16.msra.mxu0 0
    %196 = vmatprep.subr.bf16.mxu0 0
    %197 = vmatpush2.bf16.msra.mxu0 0
    %198 = vmatprep.subr.bf16.mxu0 0
    %199 = vmatpush2.bf16.msra.mxu0 0
    %200 = vmatprep.mubr.bf16.mxu0 0
    %201 = vmatmul.mubr.bf16.gmra.mxu0 %v104
    %v202 = vpop.f32.mrf.mxu0
    %v203 = vadd.f32 0.0, %v202
    %v204 = vpop.f32.mrf.mxu0
    %v205 = vpop.f32.mrf.mxu0
    %v206 = vadd.f32 0.0, %v205
    %v207 = vpop.f32.mrf.mxu0
    %208 = vmatprep.mubr.bf16.mxu0 0
    %209 = vmatmul.mubr.bf16.gmra.mxu0 %v105
    %v210 = vpop.f32.mrf.mxu0
    %v211 = vadd.f32 0.0, %v210
    %v212 = vpop.f32.mrf.mxu0
    %v213 = vpop.f32.mrf.mxu0
    %v214 = vadd.f32 0.0, %v213
    %v215 = vpop.f32.mrf.mxu0
    %216 = vmatprep.mubr.bf16.mxu0 0
    %217 = vmatmul.mubr.bf16.gmra.mxu0 %v106
    %v218 = vpop.f32.mrf.mxu0
    %v219 = vadd.f32 0.0, %v218
    %v220 = vpop.f32.mrf.mxu0
    %v221 = vpop.f32.mrf.mxu0
    %v222 = vadd.f32 0.0, %v221
    %v223 = vpop.f32.mrf.mxu0
    %224 = vmatprep.mubr.bf16.mxu0 0
    %225 = vmatmul.mubr.bf16.gmra.mxu0 %v107
    %v226 = vpop.f32.mrf.mxu0
    %v227 = vadd.f32 0.0, %v226
    %v228 = vpop.f32.mrf.mxu0
    %v229 = vpop.f32.mrf.mxu0
    %v230 = vadd.f32 0.0, %v229
    %v231 = vpop.f32.mrf.mxu0
    %232 = vmatprep.mubr.bf16.mxu0 0
    %233 = vmatmul.mubr.bf16.gmra.mxu0 %v108
    %v234 = vpop.f32.mrf.mxu0
    %v235 = vadd.f32 0.0, %v234
    %v236 = vpop.f32.mrf.mxu0
    %v237 = vpop.f32.mrf.mxu0
    %v238 = vadd.f32 0.0, %v237
    %v239 = vpop.f32.mrf.mxu0
    %240 = vmatprep.mubr.bf16.mxu0 0
    %241 = vmatmul.mubr.bf16.gmra.mxu0 %v109
    %v242 = vpop.f32.mrf.mxu0
    %v243 = vadd.f32 0.0, %v242
    %v244 = vpop.f32.mrf.mxu0
    %v245 = vpop.f32.mrf.mxu0
    %v246 = vadd.f32 0.0, %v245
    %v247 = vpop.f32.mrf.mxu0
    %248 = vmatprep.mubr.bf16.mxu0 0
    %249 = vmatmul.mubr.bf16.gmra.mxu0 %v110
    %v250 = vpop.f32.mrf.mxu0
    %v251 = vadd.f32 0.0, %v250
    %v252 = vpop.f32.mrf.mxu0
    %v253 = vpop.f32.mrf.mxu0
    %v254 = vadd.f32 0.0, %v253
    %v255 = vpop.f32.mrf.mxu0
    %256 = vmatprep.mubr.bf16.mxu0 0
    %257 = vmatmul.mubr.bf16.gmra.mxu0 %v111
    %v258 = vpop.f32.mrf.mxu0
    %v259 = vadd.f32 0.0, %v258
    %v260 = vpop.f32.mrf.mxu0
    %v261 = vpop.f32.mrf.mxu0
    %v262 = vadd.f32 0.0, %v261
    %v263 = vpop.f32.mrf.mxu0
    %264 = vdwg.mxu0
    %v265 = vpack.c.bf16 %v206, %v203
    %v266 = vpack.c.bf16 %v214, %v211
    %v267 = vpack.c.bf16 %v222, %v219
    %v268 = vpack.c.bf16 %v230, %v227
    %v269 = vpack.c.bf16 %v238, %v235
    %v270 = vpack.c.bf16 %v246, %v243
    %v271 = vpack.c.bf16 %v254, %v251
    %v272 = vpack.c.bf16 %v262, %v259
    %v281 = vunpack.c.l.b16 %v265
    %v282 = vunpack.c.h.b16 %v265
    %v283 = vunpack.c.l.b16 %v266
    %v284 = vunpack.c.h.b16 %v266
    %v285 = vunpack.c.l.b16 %v267
    %v286 = vunpack.c.h.b16 %v267
    %v287 = vunpack.c.l.b16 %v268
    %v288 = vunpack.c.h.b16 %v268
    %v289 = vunpack.c.l.b16 %v269
    %v290 = vunpack.c.h.b16 %v269
    %v291 = vunpack.c.l.b16 %v270
    %v292 = vunpack.c.h.b16 %v270
    %v293 = vunpack.c.l.b16 %v271
    %v294 = vunpack.c.h.b16 %v271
    %v295 = vunpack.c.l.b16 %v272
    %v296 = vunpack.c.h.b16 %v272
    %v297 = vpack.c.b16 %v281, %v281
    %v298 = vpack.c.b16 %v282, %v282
    %v299 = vpack.c.b16 %v283, %v283
    %v300 = vpack.c.b16 %v284, %v284
    %v301 = vpack.c.b16 %v285, %v285
    %v302 = vpack.c.b16 %v286, %v286
    %v303 = vpack.c.b16 %v287, %v287
    %v304 = vpack.c.b16 %v288, %v288
    %v305 = vpack.c.b16 %v289, %v289
    %v306 = vpack.c.b16 %v290, %v290
    %v307 = vpack.c.b16 %v291, %v291
    %v308 = vpack.c.b16 %v292, %v292
    %v309 = vpack.c.b16 %v293, %v293
    %v310 = vpack.c.b16 %v294, %v294
    %v311 = vpack.c.b16 %v295, %v295
    %v312 = vpack.c.b16 %v296, %v296
    %329 = vst [vmem:[%s2] sm:$0xf] %v297
    %330 = vst [vmem:[%s2 + $0x4] sm:$0xf] %v298
    %331 = vst [vmem:[%s2 + $0x8] sm:$0xf] %v299
    %332 = vst [vmem:[%s2 + $0xc] sm:$0xf] %v300
    %333 = vst [vmem:[%s2 + $0x10] sm:$0xf] %v301
    %334 = vst [vmem:[%s2 + $0x14] sm:$0xf] %v302
    %335 = vst [vmem:[%s2 + $0x18] sm:$0xf] %v303
    %336 = vst [vmem:[%s2 + $0x1c] sm:$0xf] %v304
    %337 = vst [vmem:[%s2 + $0x20] sm:$0xf] %v305
    %338 = vst [vmem:[%s2 + $0x24] sm:$0xf] %v306
    %339 = vst [vmem:[%s2 + $0x28] sm:$0xf] %v307
    %340 = vst [vmem:[%s2 + $0x2c] sm:$0xf] %v308
    %341 = vst [vmem:[%s2 + $0x30] sm:$0xf] %v309
    %342 = vst [vmem:[%s2 + $0x34] sm:$0xf] %v310
    %343 = vst [vmem:[%s2 + $0x38] sm:$0xf] %v311
    %344 = vst [vmem:[%s2 + $0x3c] sm:$0xf] %v312
    // Predicated region
    $region18: #{gnn_forward.5} parent=1 // pred_check
      _
    $region19: #{gnn_forward.5} parent=1 // pred_check_branch
      %346 = sbr.rel (0) target = $region21
    $region20: #{gnn_forward.5} parent=1 // pred_region
      _
    $region21: #{gnn_forward.5} parent=1 // pred_fallthru
      _
    // Predicated region
    $region22: #{gnn_forward.5} parent=1 // pred_check
      _
    $region23: #{gnn_forward.5} parent=1 // pred_check_branch
      %348 = sbr.rel (0) target = $region25
    $region24: #{gnn_forward.5} parent=1 // pred_region
      _
    $region25: #{gnn_forward.5} parent=1 // pred_fallthru
      _
    %349 = vsyncpa [#allocation3], 1
    %350 = vsyncpa [#allocation5], 1

// kernel: gnn_forward.7
$region0: #{gnn_forward.7}
  #allocation0 [shape = 'u32[]', space=smem, size = 0x4, offset = 0x4, fixed_abs, tag = 'smem constant byte address 0x4 - core index']
  #allocation1 [shape = 'u32[144,128]{1,0:T(1,128)}', space=vmem, size = 0x12000, scoped, tag = 'internal scratch']
  %s0 = inlined_call_operand.vmem [shape: bf16[128,128], index: 0, kind: input, shape index: {}]
  %s1 = inlined_call_operand.vmem [shape: bf16[128,128], index: 1, kind: input, shape index: {}]
  %s2 = inlined_call_operand.vmem [shape: bf16[128,128], index: 2, kind: output, shape index: {}]
  %s3 = sld [smem:[#allocation0]]
  $region18: #{gnn_forward.7} parent=0
    _
  %s5 = ssub.s32 1, %s3
  %s6 = scalar_select 0, %s5, %s3
  // Predicated region
  $region2: #{gnn_forward.7} parent=0 // pred_check
    _
  $region3: #{gnn_forward.7} parent=0 // pred_check_branch
    %8 = sbr.rel (0) target = $region5
  $region4: #{gnn_forward.7} parent=0 // pred_region
    _
  $region5: #{gnn_forward.7} parent=0 // pred_fallthru
    _
  // Predicated region
  $region6: #{gnn_forward.7} parent=0 // pred_check
    _
  $region7: #{gnn_forward.7} parent=0 // pred_check_branch
    %10 = sbr.rel (0) target = $region9
  $region8: #{gnn_forward.7} parent=0 // pred_region
    _
  $region9: #{gnn_forward.7} parent=0 // pred_fallthru
    _
  %v12 = vld [vmem:[%s0] sm:$0xf]
  %v13 = vld [vmem:[%s0 + $0x4] sm:$0xf]
  %v14 = vld [vmem:[%s0 + $0x8] sm:$0xf]
  %v15 = vld [vmem:[%s0 + $0xc] sm:$0xf]
  %v16 = vld [vmem:[%s0 + $0x10] sm:$0xf]
  %v17 = vld [vmem:[%s0 + $0x14] sm:$0xf]
  %v18 = vld [vmem:[%s0 + $0x18] sm:$0xf]
  %v19 = vld [vmem:[%s0 + $0x1c] sm:$0xf]
  %v20 = vld [vmem:[%s0 + $0x20] sm:$0xf]
  %v21 = vld [vmem:[%s0 + $0x24] sm:$0xf]
  %v22 = vld [vmem:[%s0 + $0x28] sm:$0xf]
  %v23 = vld [vmem:[%s0 + $0x2c] sm:$0xf]
  %v24 = vld [vmem:[%s0 + $0x30] sm:$0xf]
  %v25 = vld [vmem:[%s0 + $0x34] sm:$0xf]
  %v26 = vld [vmem:[%s0 + $0x38] sm:$0xf]
  %v27 = vld [vmem:[%s0 + $0x3c] sm:$0xf]
  %v28 = vld [vmem:[%s1] sm:$0xf]
  %v29 = vld [vmem:[%s1 + $0x4] sm:$0xf]
  %v30 = vld [vmem:[%s1 + $0x8] sm:$0xf]
  %v31 = vld [vmem:[%s1 + $0xc] sm:$0xf]
  %v32 = vld [vmem:[%s1 + $0x10] sm:$0xf]
  %v33 = vld [vmem:[%s1 + $0x14] sm:$0xf]
  %v34 = vld [vmem:[%s1 + $0x18] sm:$0xf]
  %v35 = vld [vmem:[%s1 + $0x1c] sm:$0xf]
  %v36 = vld [vmem:[%s1 + $0x20] sm:$0xf]
  %v37 = vld [vmem:[%s1 + $0x24] sm:$0xf]
  %v38 = vld [vmem:[%s1 + $0x28] sm:$0xf]
  %v39 = vld [vmem:[%s1 + $0x2c] sm:$0xf]
  %v40 = vld [vmem:[%s1 + $0x30] sm:$0xf]
  %v41 = vld [vmem:[%s1 + $0x34] sm:$0xf]
  %v42 = vld [vmem:[%s1 + $0x38] sm:$0xf]
  %v43 = vld [vmem:[%s1 + $0x3c] sm:$0xf]
  %v60 = vunpack.c.l.b16 %v12
  %v61 = vunpack.c.l.b16 %v13
  %v62 = vunpack.c.l.b16 %v14
  %v63 = vunpack.c.l.b16 %v15
  %v64 = vunpack.c.l.b16 %v16
  %v65 = vunpack.c.l.b16 %v17
  %v66 = vunpack.c.l.b16 %v18
  %v67 = vunpack.c.l.b16 %v19
  %v68 = vunpack.c.l.b16 %v20
  %v69 = vunpack.c.l.b16 %v21
  %v70 = vunpack.c.l.b16 %v22
  %v71 = vunpack.c.l.b16 %v23
  %v72 = vunpack.c.l.b16 %v24
  %v73 = vunpack.c.l.b16 %v25
  %v74 = vunpack.c.l.b16 %v26
  %v75 = vunpack.c.l.b16 %v27
  %v76 = vpack.c.b16 %v61, %v60
  %v77 = vpack.c.b16 %v63, %v62
  %v78 = vpack.c.b16 %v65, %v64
  %v79 = vpack.c.b16 %v67, %v66
  %v80 = vpack.c.b16 %v69, %v68
  %v81 = vpack.c.b16 %v71, %v70
  %v82 = vpack.c.b16 %v73, %v72
  %v83 = vpack.c.b16 %v75, %v74
  %v108 = vunpack.c.l.b16 %v28
  %v109 = vunpack.c.l.b16 %v29
  %v110 = vunpack.c.l.b16 %v30
  %v111 = vunpack.c.l.b16 %v31
  %v112 = vunpack.c.l.b16 %v32
  %v113 = vunpack.c.l.b16 %v33
  %v114 = vunpack.c.l.b16 %v34
  %v115 = vunpack.c.l.b16 %v35
  %v116 = vunpack.c.l.b16 %v36
  %v117 = vunpack.c.l.b16 %v37
  %v118 = vunpack.c.l.b16 %v38
  %v119 = vunpack.c.l.b16 %v39
  %v120 = vunpack.c.l.b16 %v40
  %v121 = vunpack.c.l.b16 %v41
  %v122 = vunpack.c.l.b16 %v42
  %v123 = vunpack.c.l.b16 %v43
  %v124 = vpack.c.b16 %v109, %v108
  %v125 = vpack.c.b16 %v111, %v110
  %v126 = vpack.c.b16 %v113, %v112
  %v127 = vpack.c.b16 %v115, %v114
  %v128 = vpack.c.b16 %v117, %v116
  %v129 = vpack.c.b16 %v119, %v118
  %v130 = vpack.c.b16 %v121, %v120
  %v131 = vpack.c.b16 %v123, %v122
  %140 = vmatprep.subr.bf16.mxu0 0
  %141 = vmatpush1.bf16.msra.mxu0 %v131
  %142 = vmatprep.subr.bf16.mxu0 0
  %143 = vmatpush1.bf16.msra.mxu0 %v130
  %144 = vmatprep.subr.bf16.mxu0 0
  %145 = vmatpush1.bf16.msra.mxu0 %v129
  %146 = vmatprep.subr.bf16.mxu0 0
  %147 = vmatpush1.bf16.msra.mxu0 %v128
  %148 = vmatprep.subr.bf16.mxu0 0
  %149 = vmatpush1.bf16.msra.mxu0 %v127
  %150 = vmatprep.subr.bf16.mxu0 0
  %151 = vmatpush1.bf16.msra.mxu0 %v126
  %152 = vmatprep.subr.bf16.mxu0 0
  %153 = vmatpush1.bf16.msra.mxu0 %v125
  %154 = vmatprep.subr.bf16.mxu0 0
  %155 = vmatpush1.bf16.msra.mxu0 %v124
  %156 = vmatprep.subr.bf16.mxu0 0
  %157 = vmatpush2.bf16.msra.mxu0 0
  %158 = vmatprep.subr.bf16.mxu0 0
  %159 = vmatpush2.bf16.msra.mxu0 0
  %160 = vmatprep.subr.bf16.mxu0 0
  %161 = vmatpush2.bf16.msra.mxu0 0
  %162 = vmatprep.subr.bf16.mxu0 0
  %163 = vmatpush2.bf16.msra.mxu0 0
  %164 = vmatprep.subr.bf16.mxu0 0
  %165 = vmatpush2.bf16.msra.mxu0 0
  %166 = vmatprep.subr.bf16.mxu0 0
  %167 = vmatpush2.bf16.msra.mxu0 0
  %168 = vmatprep.subr.bf16.mxu0 0
  %169 = vmatpush2.bf16.msra.mxu0 0
  %170 = vmatprep.subr.bf16.mxu0 0
  %171 = vmatpush2.bf16.msra.mxu0 0
  %172 = vmatprep.mubr.bf16.mxu0 0
  %173 = vmatmul.mubr.bf16.gmra.mxu0 %v76
  %v174 = vpop.f32.mrf.mxu0
  %v175 = vadd.f32 0.0, %v174
  %v176 = vpop.f32.mrf.mxu0
  %v177 = vpop.f32.mrf.mxu0
  %v178 = vadd.f32 0.0, %v177
  %v179 = vpop.f32.mrf.mxu0
  %180 = vmatprep.mubr.bf16.mxu0 0
  %181 = vmatmul.mubr.bf16.gmra.mxu0 %v77
  %v182 = vpop.f32.mrf.mxu0
  %v183 = vadd.f32 0.0, %v182
  %v184 = vpop.f32.mrf.mxu0
  %v185 = vpop.f32.mrf.mxu0
  %v186 = vadd.f32 0.0, %v185
  %v187 = vpop.f32.mrf.mxu0
  %188 = vmatprep.mubr.bf16.mxu0 0
  %189 = vmatmul.mubr.bf16.gmra.mxu0 %v78
  %v190 = vpop.f32.mrf.mxu0
  %v191 = vadd.f32 0.0, %v190
  %v192 = vpop.f32.mrf.mxu0
  %v193 = vpop.f32.mrf.mxu0
  %v194 = vadd.f32 0.0, %v193
  %v195 = vpop.f32.mrf.mxu0
  %196 = vmatprep.mubr.bf16.mxu0 0
  %197 = vmatmul.mubr.bf16.gmra.mxu0 %v79
  %v198 = vpop.f32.mrf.mxu0
  %v199 = vadd.f32 0.0, %v198
  %v200 = vpop.f32.mrf.mxu0
  %v201 = vpop.f32.mrf.mxu0
  %v202 = vadd.f32 0.0, %v201
  %v203 = vpop.f32.mrf.mxu0
  %204 = vmatprep.mubr.bf16.mxu0 0
  %205 = vmatmul.mubr.bf16.gmra.mxu0 %v80
  %v206 = vpop.f32.mrf.mxu0
  %v207 = vadd.f32 0.0, %v206
  %v208 = vpop.f32.mrf.mxu0
  %v209 = vpop.f32.mrf.mxu0
  %v210 = vadd.f32 0.0, %v209
  %v211 = vpop.f32.mrf.mxu0
  %212 = vmatprep.mubr.bf16.mxu0 0
  %213 = vmatmul.mubr.bf16.gmra.mxu0 %v81
  %v214 = vpop.f32.mrf.mxu0
  %v215 = vadd.f32 0.0, %v214
  %v216 = vpop.f32.mrf.mxu0
  %v217 = vpop.f32.mrf.mxu0
  %v218 = vadd.f32 0.0, %v217
  %v219 = vpop.f32.mrf.mxu0
  %220 = vmatprep.mubr.bf16.mxu0 0
  %221 = vmatmul.mubr.bf16.gmra.mxu0 %v82
  %v222 = vpop.f32.mrf.mxu0
  %v223 = vadd.f32 0.0, %v222
  %v224 = vpop.f32.mrf.mxu0
  %v225 = vpop.f32.mrf.mxu0
  %v226 = vadd.f32 0.0, %v225
  %v227 = vpop.f32.mrf.mxu0
  %228 = vmatprep.mubr.bf16.mxu0 0
  %229 = vmatmul.mubr.bf16.gmra.mxu0 %v83
  %v230 = vpop.f32.mrf.mxu0
  %v231 = vadd.f32 0.0, %v230
  %v232 = vpop.f32.mrf.mxu0
  %v233 = vpop.f32.mrf.mxu0
  %v234 = vadd.f32 0.0, %v233
  %v235 = vpop.f32.mrf.mxu0
  %236 = vdwg.mxu0
  %v237 = vpack.c.bf16 %v178, %v175
  %v238 = vpack.c.bf16 %v186, %v183
  %v239 = vpack.c.bf16 %v194, %v191
  %v240 = vpack.c.bf16 %v202, %v199
  %v241 = vpack.c.bf16 %v210, %v207
  %v242 = vpack.c.bf16 %v218, %v215
  %v243 = vpack.c.bf16 %v226, %v223
  %v244 = vpack.c.bf16 %v234, %v231
  %v253 = vunpack.c.l.b16 %v237
  %v254 = vunpack.c.h.b16 %v237
  %v255 = vunpack.c.l.b16 %v238
  %v256 = vunpack.c.h.b16 %v238
  %v257 = vunpack.c.l.b16 %v239
  %v258 = vunpack.c.h.b16 %v239
  %v259 = vunpack.c.l.b16 %v240
  %v260 = vunpack.c.h.b16 %v240
  %v261 = vunpack.c.l.b16 %v241
  %v262 = vunpack.c.h.b16 %v241
  %v263 = vunpack.c.l.b16 %v242
  %v264 = vunpack.c.h.b16 %v242
  %v265 = vunpack.c.l.b16 %v243
  %v266 = vunpack.c.h.b16 %v243
  %v267 = vunpack.c.l.b16 %v244
  %v268 = vunpack.c.h.b16 %v244
  %v269 = vpack.c.b16 %v253, %v253
  %v270 = vpack.c.b16 %v254, %v254
  %v271 = vpack.c.b16 %v255, %v255
  %v272 = vpack.c.b16 %v256, %v256
  %v273 = vpack.c.b16 %v257, %v257
  %v274 = vpack.c.b16 %v258, %v258
  %v275 = vpack.c.b16 %v259, %v259
  %v276 = vpack.c.b16 %v260, %v260
  %v277 = vpack.c.b16 %v261, %v261
  %v278 = vpack.c.b16 %v262, %v262
  %v279 = vpack.c.b16 %v263, %v263
  %v280 = vpack.c.b16 %v264, %v264
  %v281 = vpack.c.b16 %v265, %v265
  %v282 = vpack.c.b16 %v266, %v266
  %v283 = vpack.c.b16 %v267, %v267
  %v284 = vpack.c.b16 %v268, %v268
  %301 = vst [vmem:[%s2] sm:$0xf] %v269
  %302 = vst [vmem:[%s2 + $0x4] sm:$0xf] %v270
  %303 = vst [vmem:[%s2 + $0x8] sm:$0xf] %v271
  %304 = vst [vmem:[%s2 + $0xc] sm:$0xf] %v272
  %305 = vst [vmem:[%s2 + $0x10] sm:$0xf] %v273
  %306 = vst [vmem:[%s2 + $0x14] sm:$0xf] %v274
  %307 = vst [vmem:[%s2 + $0x18] sm:$0xf] %v275
  %308 = vst [vmem:[%s2 + $0x1c] sm:$0xf] %v276
  %309 = vst [vmem:[%s2 + $0x20] sm:$0xf] %v277
  %310 = vst [vmem:[%s2 + $0x24] sm:$0xf] %v278
  %311 = vst [vmem:[%s2 + $0x28] sm:$0xf] %v279
  %312 = vst [vmem:[%s2 + $0x2c] sm:$0xf] %v280
  %313 = vst [vmem:[%s2 + $0x30] sm:$0xf] %v281
  %314 = vst [vmem:[%s2 + $0x34] sm:$0xf] %v282
  %315 = vst [vmem:[%s2 + $0x38] sm:$0xf] %v283
  %316 = vst [vmem:[%s2 + $0x3c] sm:$0xf] %v284
  // Predicated region
  $region10: #{gnn_forward.7} parent=0 // pred_check
    _
  $region11: #{gnn_forward.7} parent=0 // pred_check_branch
    %318 = sbr.rel (0) target = $region13
  $region12: #{gnn_forward.7} parent=0 // pred_region
    _
  $region13: #{gnn_forward.7} parent=0 // pred_fallthru
    _
  // Predicated region
  $region14: #{gnn_forward.7} parent=0 // pred_check
    _
  $region15: #{gnn_forward.7} parent=0 // pred_check_branch
    %320 = sbr.rel (0) target = $region17
  $region16: #{gnn_forward.7} parent=0 // pred_region
    _
  $region17: #{gnn_forward.7} parent=0 // pred_fallthru
    _

// kernel: gnn_forward.6
$region0: #{gnn_forward.6}
  #allocation0 [shape = 'u32[]', space=smem, size = 0x4, offset = 0x4, fixed_abs, tag = 'smem constant byte address 0x4 - core index']
  #allocation1 [shape = 'u32[144,128]{1,0:T(1,128)}', space=vmem, size = 0x12000, scoped, tag = 'internal scratch']
  #allocation2 [shape = 'f32[128,128]{1,0:T(8,128)}', space=vmem, size = 0x10000, scoped, tag = 'scratch operand']
  %s0 = inlined_call_operand.vmem [shape: bf16[128,128], index: 0, kind: input, shape index: {}]
  %s1 = inlined_call_operand.vmem [shape: bf16[128,128], index: 1, kind: input, shape index: {}]
  %s2 = inlined_call_operand.vmem [shape: f32[1,128], index: 2, kind: input, shape index: {}]
  %s3 = inlined_call_operand.vmem [shape: bf16[128,128], index: 3, kind: output, shape index: {}]
  %s4 = sld [smem:[#allocation0]]
  $region30: #{gnn_forward.6} parent=0
    _
  %s6 = ssub.s32 1, %s4
  %s7 = scalar_select 0, %s6, %s4
  // Predicated region
  $region2: #{gnn_forward.6} parent=0 // pred_check
    _
  $region3: #{gnn_forward.6} parent=0 // pred_check_branch
    %9 = sbr.rel (0) target = $region5
  $region4: #{gnn_forward.6} parent=0 // pred_region
    _
  $region5: #{gnn_forward.6} parent=0 // pred_fallthru
    _
  // Predicated region
  $region6: #{gnn_forward.6} parent=0 // pred_check
    _
  $region7: #{gnn_forward.6} parent=0 // pred_check_branch
    %11 = sbr.rel (0) target = $region9
  $region8: #{gnn_forward.6} parent=0 // pred_region
    _
  $region9: #{gnn_forward.6} parent=0 // pred_fallthru
    _
  // Predicated region
  $region10: #{gnn_forward.6} parent=0 // pred_check
    _
  $region11: #{gnn_forward.6} parent=0 // pred_check_branch
    %13 = sbr.rel (0) target = $region13
  $region12: #{gnn_forward.6} parent=0 // pred_region
    _
  $region13: #{gnn_forward.6} parent=0 // pred_fallthru
    _
  %p15 = scmp.eq.s32.totalorder 0, 0
  // Predicated region
  $region14: #{gnn_forward.6} parent=0 // pred_check
    %p16 = pneg %p15
  $region15: #{gnn_forward.6} parent=0 // pred_check_branch
    %18 = sbr.rel (%p16) target = $region17
  $region16: #{gnn_forward.6} parent=0 // pred_region
    %19 = vst [vmem:[#allocation2] sm:$0xff] 0.0
    %20 = vst [vmem:[#allocation2 + $0x8] sm:$0xff] 0.0
    %21 = vst [vmem:[#allocation2 + $0x10] sm:$0xff] 0.0
    %22 = vst [vmem:[#allocation2 + $0x18] sm:$0xff] 0.0
    %23 = vst [vmem:[#allocation2 + $0x20] sm:$0xff] 0.0
    %24 = vst [vmem:[#allocation2 + $0x28] sm:$0xff] 0.0
    %25 = vst [vmem:[#allocation2 + $0x30] sm:$0xff] 0.0
    %26 = vst [vmem:[#allocation2 + $0x38] sm:$0xff] 0.0
    %27 = vst [vmem:[#allocation2 + $0x40] sm:$0xff] 0.0
    %28 = vst [vmem:[#allocation2 + $0x48] sm:$0xff] 0.0
    %29 = vst [vmem:[#allocation2 + $0x50] sm:$0xff] 0.0
    %30 = vst [vmem:[#allocation2 + $0x58] sm:$0xff] 0.0
    %31 = vst [vmem:[#allocation2 + $0x60] sm:$0xff] 0.0
    %32 = vst [vmem:[#allocation2 + $0x68] sm:$0xff] 0.0
    %33 = vst [vmem:[#allocation2 + $0x70] sm:$0xff] 0.0
    %34 = vst [vmem:[#allocation2 + $0x78] sm:$0xff] 0.0
  $region17: #{gnn_forward.6} parent=0 // pred_fallthru
    _
  %v35 = vld [vmem:[#allocation2] sm:$0xff]
  %v36 = vld [vmem:[#allocation2 + $0x8] sm:$0xff]
  %v37 = vld [vmem:[#allocation2 + $0x10] sm:$0xff]
  %v38 = vld [vmem:[#allocation2 + $0x18] sm:$0xff]
  %v39 = vld [vmem:[#allocation2 + $0x20] sm:$0xff]
  %v40 = vld [vmem:[#allocation2 + $0x28] sm:$0xff]
  %v41 = vld [vmem:[#allocation2 + $0x30] sm:$0xff]
  %v42 = vld [vmem:[#allocation2 + $0x38] sm:$0xff]
  %v43 = vld [vmem:[#allocation2 + $0x40] sm:$0xff]
  %v44 = vld [vmem:[#allocation2 + $0x48] sm:$0xff]
  %v45 = vld [vmem:[#allocation2 + $0x50] sm:$0xff]
  %v46 = vld [vmem:[#allocation2 + $0x58] sm:$0xff]
  %v47 = vld [vmem:[#allocation2 + $0x60] sm:$0xff]
  %v48 = vld [vmem:[#allocation2 + $0x68] sm:$0xff]
  %v49 = vld [vmem:[#allocation2 + $0x70] sm:$0xff]
  %v50 = vld [vmem:[#allocation2 + $0x78] sm:$0xff]
  %v51 = vld [vmem:[%s0] sm:$0xf]
  %v52 = vld [vmem:[%s0 + $0x4] sm:$0xf]
  %v53 = vld [vmem:[%s0 + $0x8] sm:$0xf]
  %v54 = vld [vmem:[%s0 + $0xc] sm:$0xf]
  %v55 = vld [vmem:[%s0 + $0x10] sm:$0xf]
  %v56 = vld [vmem:[%s0 + $0x14] sm:$0xf]
  %v57 = vld [vmem:[%s0 + $0x18] sm:$0xf]
  %v58 = vld [vmem:[%s0 + $0x1c] sm:$0xf]
  %v59 = vld [vmem:[%s0 + $0x20] sm:$0xf]
  %v60 = vld [vmem:[%s0 + $0x24] sm:$0xf]
  %v61 = vld [vmem:[%s0 + $0x28] sm:$0xf]
  %v62 = vld [vmem:[%s0 + $0x2c] sm:$0xf]
  %v63 = vld [vmem:[%s0 + $0x30] sm:$0xf]
  %v64 = vld [vmem:[%s0 + $0x34] sm:$0xf]
  %v65 = vld [vmem:[%s0 + $0x38] sm:$0xf]
  %v66 = vld [vmem:[%s0 + $0x3c] sm:$0xf]
  %v67 = vld [vmem:[%s1] sm:$0xf]
  %v68 = vld [vmem:[%s1 + $0x4] sm:$0xf]
  %v69 = vld [vmem:[%s1 + $0x8] sm:$0xf]
  %v70 = vld [vmem:[%s1 + $0xc] sm:$0xf]
  %v71 = vld [vmem:[%s1 + $0x10] sm:$0xf]
  %v72 = vld [vmem:[%s1 + $0x14] sm:$0xf]
  %v73 = vld [vmem:[%s1 + $0x18] sm:$0xf]
  %v74 = vld [vmem:[%s1 + $0x1c] sm:$0xf]
  %v75 = vld [vmem:[%s1 + $0x20] sm:$0xf]
  %v76 = vld [vmem:[%s1 + $0x24] sm:$0xf]
  %v77 = vld [vmem:[%s1 + $0x28] sm:$0xf]
  %v78 = vld [vmem:[%s1 + $0x2c] sm:$0xf]
  %v79 = vld [vmem:[%s1 + $0x30] sm:$0xf]
  %v80 = vld [vmem:[%s1 + $0x34] sm:$0xf]
  %v81 = vld [vmem:[%s1 + $0x38] sm:$0xf]
  %v82 = vld [vmem:[%s1 + $0x3c] sm:$0xf]
  %v99 = vunpack.c.l.b16 %v51
  %v100 = vunpack.c.l.b16 %v52
  %v101 = vunpack.c.l.b16 %v53
  %v102 = vunpack.c.l.b16 %v54
  %v103 = vunpack.c.l.b16 %v55
  %v104 = vunpack.c.l.b16 %v56
  %v105 = vunpack.c.l.b16 %v57
  %v106 = vunpack.c.l.b16 %v58
  %v107 = vunpack.c.l.b16 %v59
  %v108 = vunpack.c.l.b16 %v60
  %v109 = vunpack.c.l.b16 %v61
  %v110 = vunpack.c.l.b16 %v62
  %v111 = vunpack.c.l.b16 %v63
  %v112 = vunpack.c.l.b16 %v64
  %v113 = vunpack.c.l.b16 %v65
  %v114 = vunpack.c.l.b16 %v66
  %v115 = vpack.c.b16 %v100, %v99
  %v116 = vpack.c.b16 %v102, %v101
  %v117 = vpack.c.b16 %v104, %v103
  %v118 = vpack.c.b16 %v106, %v105
  %v119 = vpack.c.b16 %v108, %v107
  %v120 = vpack.c.b16 %v110, %v109
  %v121 = vpack.c.b16 %v112, %v111
  %v122 = vpack.c.b16 %v114, %v113
  %v147 = vunpack.c.l.b16 %v67
  %v148 = vunpack.c.l.b16 %v68
  %v149 = vunpack.c.l.b16 %v69
  %v150 = vunpack.c.l.b16 %v70
  %v151 = vunpack.c.l.b16 %v71
  %v152 = vunpack.c.l.b16 %v72
  %v153 = vunpack.c.l.b16 %v73
  %v154 = vunpack.c.l.b16 %v74
  %v155 = vunpack.c.l.b16 %v75
  %v156 = vunpack.c.l.b16 %v76
  %v157 = vunpack.c.l.b16 %v77
  %v158 = vunpack.c.l.b16 %v78
  %v159 = vunpack.c.l.b16 %v79
  %v160 = vunpack.c.l.b16 %v80
  %v161 = vunpack.c.l.b16 %v81
  %v162 = vunpack.c.l.b16 %v82
  %v163 = vpack.c.b16 %v148, %v147
  %v164 = vpack.c.b16 %v150, %v149
  %v165 = vpack.c.b16 %v152, %v151
  %v166 = vpack.c.b16 %v154, %v153
  %v167 = vpack.c.b16 %v156, %v155
  %v168 = vpack.c.b16 %v158, %v157
  %v169 = vpack.c.b16 %v160, %v159
  %v170 = vpack.c.b16 %v162, %v161
  %179 = vmatprep.subr.bf16.mxu0 0
  %180 = vmatpush1.bf16.msra.mxu0 %v170
  %181 = vmatprep.subr.bf16.mxu0 0
  %182 = vmatpush1.bf16.msra.mxu0 %v169
  %183 = vmatprep.subr.bf16.mxu0 0
  %184 = vmatpush1.bf16.msra.mxu0 %v168
  %185 = vmatprep.subr.bf16.mxu0 0
  %186 = vmatpush1.bf16.msra.mxu0 %v167
  %187 = vmatprep.subr.bf16.mxu0 0
  %188 = vmatpush1.bf16.msra.mxu0 %v166
  %189 = vmatprep.subr.bf16.mxu0 0
  %190 = vmatpush1.bf16.msra.mxu0 %v165
  %191 = vmatprep.subr.bf16.mxu0 0
  %192 = vmatpush1.bf16.msra.mxu0 %v164
  %193 = vmatprep.subr.bf16.mxu0 0
  %194 = vmatpush1.bf16.msra.mxu0 %v163
  %195 = vmatprep.subr.bf16.mxu0 0
  %196 = vmatpush2.bf16.msra.mxu0 0
  %197 = vmatprep.subr.bf16.mxu0 0
  %198 = vmatpush2.bf16.msra.mxu0 0
  %199 = vmatprep.subr.bf16.mxu0 0
  %200 = vmatpush2.bf16.msra.mxu0 0
  %201 = vmatprep.subr.bf16.mxu0 0
  %202 = vmatpush2.bf16.msra.mxu0 0
  %203 = vmatprep.subr.bf16.mxu0 0
  %204 = vmatpush2.bf16.msra.mxu0 0
  %205 = vmatprep.subr.bf16.mxu0 0
  %206 = vmatpush2.bf16.msra.mxu0 0
  %207 = vmatprep.subr.bf16.mxu0 0
  %208 = vmatpush2.bf16.msra.mxu0 0
  %209 = vmatprep.subr.bf16.mxu0 0
  %210 = vmatpush2.bf16.msra.mxu0 0
  %211 = vmatprep.mubr.bf16.mxu0 0
  %212 = vmatmul.mubr.bf16.gmra.mxu0 %v115
  %v213 = vpop.f32.mrf.mxu0
  %v214 = vadd.f32 0.0, %v213
  %v215 = vpop.f32.mrf.mxu0
  %v216 = vpop.f32.mrf.mxu0
  %v217 = vadd.f32 0.0, %v216
  %v218 = vpop.f32.mrf.mxu0
  %219 = vmatprep.mubr.bf16.mxu0 0
  %220 = vmatmul.mubr.bf16.gmra.mxu0 %v116
  %v221 = vpop.f32.mrf.mxu0
  %v222 = vadd.f32 0.0, %v221
  %v223 = vpop.f32.mrf.mxu0
  %v224 = vpop.f32.mrf.mxu0
  %v225 = vadd.f32 0.0, %v224
  %v226 = vpop.f32.mrf.mxu0
  %227 = vmatprep.mubr.bf16.mxu0 0
  %228 = vmatmul.mubr.bf16.gmra.mxu0 %v117
  %v229 = vpop.f32.mrf.mxu0
  %v230 = vadd.f32 0.0, %v229
  %v231 = vpop.f32.mrf.mxu0
  %v232 = vpop.f32.mrf.mxu0
  %v233 = vadd.f32 0.0, %v232
  %v234 = vpop.f32.mrf.mxu0
  %235 = vmatprep.mubr.bf16.mxu0 0
  %236 = vmatmul.mubr.bf16.gmra.mxu0 %v118
  %v237 = vpop.f32.mrf.mxu0
  %v238 = vadd.f32 0.0, %v237
  %v239 = vpop.f32.mrf.mxu0
  %v240 = vpop.f32.mrf.mxu0
  %v241 = vadd.f32 0.0, %v240
  %v242 = vpop.f32.mrf.mxu0
  %243 = vmatprep.mubr.bf16.mxu0 0
  %244 = vmatmul.mubr.bf16.gmra.mxu0 %v119
  %v245 = vpop.f32.mrf.mxu0
  %v246 = vadd.f32 0.0, %v245
  %v247 = vpop.f32.mrf.mxu0
  %v248 = vpop.f32.mrf.mxu0
  %v249 = vadd.f32 0.0, %v248
  %v250 = vpop.f32.mrf.mxu0
  %251 = vmatprep.mubr.bf16.mxu0 0
  %252 = vmatmul.mubr.bf16.gmra.mxu0 %v120
  %v253 = vpop.f32.mrf.mxu0
  %v254 = vadd.f32 0.0, %v253
  %v255 = vpop.f32.mrf.mxu0
  %v256 = vpop.f32.mrf.mxu0
  %v257 = vadd.f32 0.0, %v256
  %v258 = vpop.f32.mrf.mxu0
  %259 = vmatprep.mubr.bf16.mxu0 0
  %260 = vmatmul.mubr.bf16.gmra.mxu0 %v121
  %v261 = vpop.f32.mrf.mxu0
  %v262 = vadd.f32 0.0, %v261
  %v263 = vpop.f32.mrf.mxu0
  %v264 = vpop.f32.mrf.mxu0
  %v265 = vadd.f32 0.0, %v264
  %v266 = vpop.f32.mrf.mxu0
  %267 = vmatprep.mubr.bf16.mxu0 0
  %268 = vmatmul.mubr.bf16.gmra.mxu0 %v122
  %v269 = vpop.f32.mrf.mxu0
  %v270 = vadd.f32 0.0, %v269
  %v271 = vpop.f32.mrf.mxu0
  %v272 = vpop.f32.mrf.mxu0
  %v273 = vadd.f32 0.0, %v272
  %v274 = vpop.f32.mrf.mxu0
  %275 = vdwg.mxu0
  %v276 = vadd.f32 %v35, %v214
  %v277 = vadd.f32 %v36, %v217
  %v278 = vadd.f32 %v37, %v222
  %v279 = vadd.f32 %v38, %v225
  %v280 = vadd.f32 %v39, %v230
  %v281 = vadd.f32 %v40, %v233
  %v282 = vadd.f32 %v41, %v238
  %v283 = vadd.f32 %v42, %v241
  %v284 = vadd.f32 %v43, %v246
  %v285 = vadd.f32 %v44, %v249
  %v286 = vadd.f32 %v45, %v254
  %v287 = vadd.f32 %v46, %v257
  %v288 = vadd.f32 %v47, %v262
  %v289 = vadd.f32 %v48, %v265
  %v290 = vadd.f32 %v49, %v270
  %v291 = vadd.f32 %v50, %v273
  %292 = vst [vmem:[#allocation2] sm:$0xff] %v276
  %293 = vst [vmem:[#allocation2 + $0x8] sm:$0xff] %v277
  %294 = vst [vmem:[#allocation2 + $0x10] sm:$0xff] %v278
  %295 = vst [vmem:[#allocation2 + $0x18] sm:$0xff] %v279
  %296 = vst [vmem:[#allocation2 + $0x20] sm:$0xff] %v280
  %297 = vst [vmem:[#allocation2 + $0x28] sm:$0xff] %v281
  %298 = vst [vmem:[#allocation2 + $0x30] sm:$0xff] %v282
  %299 = vst [vmem:[#allocation2 + $0x38] sm:$0xff] %v283
  %300 = vst [vmem:[#allocation2 + $0x40] sm:$0xff] %v284
  %301 = vst [vmem:[#allocation2 + $0x48] sm:$0xff] %v285
  %302 = vst [vmem:[#allocation2 + $0x50] sm:$0xff] %v286
  %303 = vst [vmem:[#allocation2 + $0x58] sm:$0xff] %v287
  %304 = vst [vmem:[#allocation2 + $0x60] sm:$0xff] %v288
  %305 = vst [vmem:[#allocation2 + $0x68] sm:$0xff] %v289
  %306 = vst [vmem:[#allocation2 + $0x70] sm:$0xff] %v290
  %307 = vst [vmem:[#allocation2 + $0x78] sm:$0xff] %v291
  // Predicated region
  $region18: #{gnn_forward.6} parent=0 // pred_check
    %p308 = pneg %p15
  $region19: #{gnn_forward.6} parent=0 // pred_check_branch
    %310 = sbr.rel (%p308) target = $region21
  $region20: #{gnn_forward.6} parent=0 // pred_region
    %v311 = vld [vmem:[#allocation2] sm:$0xff]
    %v312 = vld [vmem:[#allocation2 + $0x8] sm:$0xff]
    %v313 = vld [vmem:[#allocation2 + $0x10] sm:$0xff]
    %v314 = vld [vmem:[#allocation2 + $0x18] sm:$0xff]
    %v315 = vld [vmem:[#allocation2 + $0x20] sm:$0xff]
    %v316 = vld [vmem:[#allocation2 + $0x28] sm:$0xff]
    %v317 = vld [vmem:[#allocation2 + $0x30] sm:$0xff]
    %v318 = vld [vmem:[#allocation2 + $0x38] sm:$0xff]
    %v319 = vld [vmem:[#allocation2 + $0x40] sm:$0xff]
    %v320 = vld [vmem:[#allocation2 + $0x48] sm:$0xff]
    %v321 = vld [vmem:[#allocation2 + $0x50] sm:$0xff]
    %v322 = vld [vmem:[#allocation2 + $0x58] sm:$0xff]
    %v323 = vld [vmem:[#allocation2 + $0x60] sm:$0xff]
    %v324 = vld [vmem:[#allocation2 + $0x68] sm:$0xff]
    %v325 = vld [vmem:[#allocation2 + $0x70] sm:$0xff]
    %v326 = vld [vmem:[#allocation2 + $0x78] sm:$0xff]
    %v327 = vld [vmem:[%s2] sm:$0x1]
    %v329 = vlaneseq
    %v330 = vshrl.u32 %v329, 7
    %v331 = vsub.s32 0, %v330
    %v332 = vrot.slane %v327, %v331
    %v334 = vadd.f32 %v311, %v332
    %v335 = vadd.f32 %v312, %v332
    %v336 = vadd.f32 %v313, %v332
    %v337 = vadd.f32 %v314, %v332
    %v338 = vadd.f32 %v315, %v332
    %v339 = vadd.f32 %v316, %v332
    %v340 = vadd.f32 %v317, %v332
    %v341 = vadd.f32 %v318, %v332
    %v342 = vadd.f32 %v319, %v332
    %v343 = vadd.f32 %v320, %v332
    %v344 = vadd.f32 %v321, %v332
    %v345 = vadd.f32 %v322, %v332
    %v346 = vadd.f32 %v323, %v332
    %v347 = vadd.f32 %v324, %v332
    %v348 = vadd.f32 %v325, %v332
    %v349 = vadd.f32 %v326, %v332
    %v350 = vmax.f32 %v334, 0.0
    %v351 = vmax.f32 %v335, 0.0
    %v352 = vmax.f32 %v336, 0.0
    %v353 = vmax.f32 %v337, 0.0
    %v354 = vmax.f32 %v338, 0.0
    %v355 = vmax.f32 %v339, 0.0
    %v356 = vmax.f32 %v340, 0.0
    %v357 = vmax.f32 %v341, 0.0
    %v358 = vmax.f32 %v342, 0.0
    %v359 = vmax.f32 %v343, 0.0
    %v360 = vmax.f32 %v344, 0.0
    %v361 = vmax.f32 %v345, 0.0
    %v362 = vmax.f32 %v346, 0.0
    %v363 = vmax.f32 %v347, 0.0
    %v364 = vmax.f32 %v348, 0.0
    %v365 = vmax.f32 %v349, 0.0
    %v366 = vpack.c.bf16 %v351, %v350
    %v367 = vpack.c.bf16 %v353, %v352
    %v368 = vpack.c.bf16 %v355, %v354
    %v369 = vpack.c.bf16 %v357, %v356
    %v370 = vpack.c.bf16 %v359, %v358
    %v371 = vpack.c.bf16 %v361, %v360
    %v372 = vpack.c.bf16 %v363, %v362
    %v373 = vpack.c.bf16 %v365, %v364
    %v382 = vunpack.c.l.b16 %v366
    %v383 = vunpack.c.h.b16 %v366
    %v384 = vunpack.c.l.b16 %v367
    %v385 = vunpack.c.h.b16 %v367
    %v386 = vunpack.c.l.b16 %v368
    %v387 = vunpack.c.h.b16 %v368
    %v388 = vunpack.c.l.b16 %v369
    %v389 = vunpack.c.h.b16 %v369
    %v390 = vunpack.c.l.b16 %v370
    %v391 = vunpack.c.h.b16 %v370
    %v392 = vunpack.c.l.b16 %v371
    %v393 = vunpack.c.h.b16 %v371
    %v394 = vunpack.c.l.b16 %v372
    %v395 = vunpack.c.h.b16 %v372
    %v396 = vunpack.c.l.b16 %v373
    %v397 = vunpack.c.h.b16 %v373
    %v398 = vpack.c.b16 %v382, %v382
    %v399 = vpack.c.b16 %v383, %v383
    %v400 = vpack.c.b16 %v384, %v384
    %v401 = vpack.c.b16 %v385, %v385
    %v402 = vpack.c.b16 %v386, %v386
    %v403 = vpack.c.b16 %v387, %v387
    %v404 = vpack.c.b16 %v388, %v388
    %v405 = vpack.c.b16 %v389, %v389
    %v406 = vpack.c.b16 %v390, %v390
    %v407 = vpack.c.b16 %v391, %v391
    %v408 = vpack.c.b16 %v392, %v392
    %v409 = vpack.c.b16 %v393, %v393
    %v410 = vpack.c.b16 %v394, %v394
    %v411 = vpack.c.b16 %v395, %v395
    %v412 = vpack.c.b16 %v396, %v396
    %v413 = vpack.c.b16 %v397, %v397
    %430 = vst [vmem:[%s3] sm:$0xf] %v398
    %431 = vst [vmem:[%s3 + $0x4] sm:$0xf] %v399
    %432 = vst [vmem:[%s3 + $0x8] sm:$0xf] %v400
    %433 = vst [vmem:[%s3 + $0xc] sm:$0xf] %v401
    %434 = vst [vmem:[%s3 + $0x10] sm:$0xf] %v402
    %435 = vst [vmem:[%s3 + $0x14] sm:$0xf] %v403
    %436 = vst [vmem:[%s3 + $0x18] sm:$0xf] %v404
    %437 = vst [vmem:[%s3 + $0x1c] sm:$0xf] %v405
    %438 = vst [vmem:[%s3 + $0x20] sm:$0xf] %v406
    %439 = vst [vmem:[%s3 + $0x24] sm:$0xf] %v407
    %440 = vst [vmem:[%s3 + $0x28] sm:$0xf] %v408
    %441 = vst [vmem:[%s3 + $0x2c] sm:$0xf] %v409
    %442 = vst [vmem:[%s3 + $0x30] sm:$0xf] %v410
    %443 = vst [vmem:[%s3 + $0x34] sm:$0xf] %v411
    %444 = vst [vmem:[%s3 + $0x38] sm:$0xf] %v412
    %445 = vst [vmem:[%s3 + $0x3c] sm:$0xf] %v413
  $region21: #{gnn_forward.6} parent=0 // pred_fallthru
    _
  // Predicated region
  $region22: #{gnn_forward.6} parent=0 // pred_check
    _
  $region23: #{gnn_forward.6} parent=0 // pred_check_branch
    %447 = sbr.rel (0) target = $region25
  $region24: #{gnn_forward.6} parent=0 // pred_region
    _
  $region25: #{gnn_forward.6} parent=0 // pred_fallthru
    _
  // Predicated region
  $region26: #{gnn_forward.6} parent=0 // pred_check
    _
  $region27: #{gnn_forward.6} parent=0 // pred_check_branch
    %449 = sbr.rel (0) target = $region29
  $region28: #{gnn_forward.6} parent=0 // pred_region
    _
  $region29: #{gnn_forward.6} parent=0 // pred_fallthru
    _

// kernel: gnn_forward.9
$region0: #{gnn_forward.9}
  #allocation0 [shape = 'u32[]', space=smem, size = 0x4, offset = 0x4, fixed_abs, tag = 'smem constant byte address 0x4 - core index']
  #allocation1 [shape = 'u32[144,128]{1,0:T(1,128)}', space=vmem, size = 0x12000, scoped, tag = 'internal scratch']
  #allocation2 [shape = 'f32[8,256]{1,0:T(8,128)}', space=vmem, size = 0x2000, scoped, tag = 'scratch operand']
  #allocation3 [shape = 's32[1]{0}', space=sflag, size = 0x4, scoped, tag = 'scoped memory for gnn_forward.9']
  #allocation4 [shape = 'u8[512]{0}', space=smem, size = 0x200, scoped, tag = 'prefetched SMEM operand 0']
  #allocation5 [shape = 'u8[512]{0}', space=smem, size = 0x200, scoped, tag = 'prefetched SMEM operand 1']
  %s0 = inlined_call_operand.vmem [shape: s32[8], index: 0, kind: input, shape index: {}]
  %s1 = inlined_call_operand.vmem [shape: s32[8], index: 1, kind: input, shape index: {}]
  %s2 = inlined_call_operand.vmem [shape: f32[128,128], index: 2, kind: input, shape index: {}]
  %s3 = inlined_call_operand.vmem [shape: bf16[256,128], index: 3, kind: input, shape index: {}]
  %s4 = inlined_call_operand.vmem [shape: f32[1,128], index: 4, kind: input, shape index: {}]
  %s5 = inlined_call_operand.vmem [shape: bf16[128,128], index: 5, kind: input, shape index: {}]
  %s6 = inlined_call_operand.vmem [shape: f32[1,128], index: 6, kind: input, shape index: {}]
  %s7 = inlined_call_operand.vmem [shape: f32[8,128], index: 7, kind: output, shape index: {}]
  %s8 = sld [smem:[#allocation0]]
  $region30: #{gnn_forward.9} parent=0
    _
  %s10 = ssub.s32 1, %s8
  %s11 = scalar_select 0, %s10, %s8
  %s12 = sshll.u32 %s0, 4
  %s13 = int_to_ptr.vmem [resolvable:$true] %s12
  %15 = dma.vmem_to_smem %s13, 16, [#allocation4], [#allocation3]
  %s16 = sshll.u32 %s1, 4
  %s17 = int_to_ptr.vmem [resolvable:$true] %s16
  %19 = dma.vmem_to_smem %s17, 16, [#allocation5], [#allocation3]
  %20 = dma.done [#allocation3], 32
  %21 = sfence
  // Predicated region
  $region2: #{gnn_forward.9} parent=0 // pred_check
    _
  $region3: #{gnn_forward.9} parent=0 // pred_check_branch
    %23 = sbr.rel (0) target = $region5
  $region4: #{gnn_forward.9} parent=0 // pred_region
    _
  $region5: #{gnn_forward.9} parent=0 // pred_fallthru
    _
  // Predicated region
  $region6: #{gnn_forward.9} parent=0 // pred_check
    _
  $region7: #{gnn_forward.9} parent=0 // pred_check_branch
    %25 = sbr.rel (0) target = $region9
  $region8: #{gnn_forward.9} parent=0 // pred_region
    _
  $region9: #{gnn_forward.9} parent=0 // pred_fallthru
    _
  // Predicated region
  $region10: #{gnn_forward.9} parent=0 // pred_check
    _
  $region11: #{gnn_forward.9} parent=0 // pred_check_branch
    %27 = sbr.rel (0) target = $region13
  $region12: #{gnn_forward.9} parent=0 // pred_region
    _
  $region13: #{gnn_forward.9} parent=0 // pred_fallthru
    _
  // Predicated region
  $region14: #{gnn_forward.9} parent=0 // pred_check
    _
  $region15: #{gnn_forward.9} parent=0 // pred_check_branch
    %29 = sbr.rel (0) target = $region17
  $region16: #{gnn_forward.9} parent=0 // pred_region
    _
  $region17: #{gnn_forward.9} parent=0 // pred_fallthru
    _
  // Predicated region
  $region18: #{gnn_forward.9} parent=0 // pred_check
    _
  $region19: #{gnn_forward.9} parent=0 // pred_check_branch
    %31 = sbr.rel (0) target = $region21
  $region20: #{gnn_forward.9} parent=0 // pred_region
    _
  $region21: #{gnn_forward.9} parent=0 // pred_fallthru
    _
  %s33 = smul.u32 0, 8
  %s34 = sld [smem:[#allocation4 + %s33]]
  %s35 = scalar_lea.vmem %s2, %s34
  %v36 = vld [vmem:[%s35] sm:$0x1]
  %37 = vst [vmem:[#allocation2] sm:$0x1] %v36
  %s38 = sld [smem:[#allocation5 + %s33]]
  %s39 = scalar_lea.vmem %s2, %s38
  %v40 = vld [vmem:[%s39] sm:$0x1]
  %41 = vst [vmem:[#allocation2 + $0x8] sm:$0x1] %v40
  %s42 = sadd.s32 %s33, 1
  %s43 = sld [smem:[#allocation4 + %s42]]
  %s44 = scalar_lea.vmem %s2, %s43
  %v45 = vld [vmem:[%s44] sm:$0x1]
  %46 = vst [vmem:[#allocation2 + $0x1] sm:$0x1] %v45
  %s47 = sld [smem:[#allocation5 + %s42]]
  %s48 = scalar_lea.vmem %s2, %s47
  %v49 = vld [vmem:[%s48] sm:$0x1]
  %50 = vst [vmem:[#allocation2 + $0x9] sm:$0x1] %v49
  %s51 = sadd.s32 %s33, 2
  %s52 = sld [smem:[#allocation4 + %s51]]
  %s53 = scalar_lea.vmem %s2, %s52
  %v54 = vld [vmem:[%s53] sm:$0x1]
  %55 = vst [vmem:[#allocation2 + $0x2] sm:$0x1] %v54
  %s56 = sld [smem:[#allocation5 + %s51]]
  %s57 = scalar_lea.vmem %s2, %s56
  %v58 = vld [vmem:[%s57] sm:$0x1]
  %59 = vst [vmem:[#allocation2 + $0xa] sm:$0x1] %v58
  %s60 = sadd.s32 %s33, 3
  %s61 = sld [smem:[#allocation4 + %s60]]
  %s62 = scalar_lea.vmem %s2, %s61
  %v63 = vld [vmem:[%s62] sm:$0x1]
  %64 = vst [vmem:[#allocation2 + $0x3] sm:$0x1] %v63
  %s65 = sld [smem:[#allocation5 + %s60]]
  %s66 = scalar_lea.vmem %s2, %s65
  %v67 = vld [vmem:[%s66] sm:$0x1]
  %68 = vst [vmem:[#allocation2 + $0xb] sm:$0x1] %v67
  %s69 = sadd.s32 %s33, 4
  %s70 = sld [smem:[#allocation4 + %s69]]
  %s71 = scalar_lea.vmem %s2, %s70
  %v72 = vld [vmem:[%s71] sm:$0x1]
  %73 = vst [vmem:[#allocation2 + $0x4] sm:$0x1] %v72
  %s74 = sld [smem:[#allocation5 + %s69]]
  %s75 = scalar_lea.vmem %s2, %s74
  %v76 = vld [vmem:[%s75] sm:$0x1]
  %77 = vst [vmem:[#allocation2 + $0xc] sm:$0x1] %v76
  %s78 = sadd.s32 %s33, 5
  %s79 = sld [smem:[#allocation4 + %s78]]
  %s80 = scalar_lea.vmem %s2, %s79
  %v81 = vld [vmem:[%s80] sm:$0x1]
  %82 = vst [vmem:[#allocation2 + $0x5] sm:$0x1] %v81
  %s83 = sld [smem:[#allocation5 + %s78]]
  %s84 = scalar_lea.vmem %s2, %s83
  %v85 = vld [vmem:[%s84] sm:$0x1]
  %86 = vst [vmem:[#allocation2 + $0xd] sm:$0x1] %v85
  %s87 = sadd.s32 %s33, 6
  %s88 = sld [smem:[#allocation4 + %s87]]
  %s89 = scalar_lea.vmem %s2, %s88
  %v90 = vld [vmem:[%s89] sm:$0x1]
  %91 = vst [vmem:[#allocation2 + $0x6] sm:$0x1] %v90
  %s92 = sld [smem:[#allocation5 + %s87]]
  %s93 = scalar_lea.vmem %s2, %s92
  %v94 = vld [vmem:[%s93] sm:$0x1]
  %95 = vst [vmem:[#allocation2 + $0xe] sm:$0x1] %v94
  %s96 = sadd.s32 %s33, 7
  %s97 = sld [smem:[#allocation4 + %s96]]
  %s98 = scalar_lea.vmem %s2, %s97
  %v99 = vld [vmem:[%s98] sm:$0x1]
  %100 = vst [vmem:[#allocation2 + $0x7] sm:$0x1] %v99
  %s101 = sld [smem:[#allocation5 + %s96]]
  %s102 = scalar_lea.vmem %s2, %s101
  %v103 = vld [vmem:[%s102] sm:$0x1]
  %104 = vst [vmem:[#allocation2 + $0xf] sm:$0x1] %v103
  %v105 = vld [vmem:[#allocation2] sm:$0xff]
  %v106 = vld [vmem:[#allocation2 + $0x8] sm:$0xff]
  %v107 = vpack.c.bf16 %v105, %v105
  %v108 = vpack.c.bf16 %v106, %v106
  %v109 = vld [vmem:[%s3] sm:$0xf]
  %v110 = vld [vmem:[%s3 + $0x4] sm:$0xf]
  %v111 = vld [vmem:[%s3 + $0x8] sm:$0xf]
  %v112 = vld [vmem:[%s3 + $0xc] sm:$0xf]
  %v113 = vld [vmem:[%s3 + $0x10] sm:$0xf]
  %v114 = vld [vmem:[%s3 + $0x14] sm:$0xf]
  %v115 = vld [vmem:[%s3 + $0x18] sm:$0xf]
  %v116 = vld [vmem:[%s3 + $0x1c] sm:$0xf]
  %v117 = vld [vmem:[%s3 + $0x20] sm:$0xf]
  %v118 = vld [vmem:[%s3 + $0x24] sm:$0xf]
  %v119 = vld [vmem:[%s3 + $0x28] sm:$0xf]
  %v120 = vld [vmem:[%s3 + $0x2c] sm:$0xf]
  %v121 = vld [vmem:[%s3 + $0x30] sm:$0xf]
  %v122 = vld [vmem:[%s3 + $0x34] sm:$0xf]
  %v123 = vld [vmem:[%s3 + $0x38] sm:$0xf]
  %v124 = vld [vmem:[%s3 + $0x3c] sm:$0xf]
  %v125 = vld [vmem:[%s3 + $0x40] sm:$0xf]
  %v126 = vld [vmem:[%s3 + $0x44] sm:$0xf]
  %v127 = vld [vmem:[%s3 + $0x48] sm:$0xf]
  %v128 = vld [vmem:[%s3 + $0x4c] sm:$0xf]
  %v129 = vld [vmem:[%s3 + $0x50] sm:$0xf]
  %v130 = vld [vmem:[%s3 + $0x54] sm:$0xf]
  %v131 = vld [vmem:[%s3 + $0x58] sm:$0xf]
  %v132 = vld [vmem:[%s3 + $0x5c] sm:$0xf]
  %v133 = vld [vmem:[%s3 + $0x60] sm:$0xf]
  %v134 = vld [vmem:[%s3 + $0x64] sm:$0xf]
  %v135 = vld [vmem:[%s3 + $0x68] sm:$0xf]
  %v136 = vld [vmem:[%s3 + $0x6c] sm:$0xf]
  %v137 = vld [vmem:[%s3 + $0x70] sm:$0xf]
  %v138 = vld [vmem:[%s3 + $0x74] sm:$0xf]
  %v139 = vld [vmem:[%s3 + $0x78] sm:$0xf]
  %v140 = vld [vmem:[%s3 + $0x7c] sm:$0xf]
  %v141 = vld [vmem:[%s4] sm:$0x1]
  %v143 = vlaneseq
  %v144 = vshrl.u32 %v143, 7
  %v145 = vsub.s32 0, %v144
  %v146 = vrot.slane %v141, %v145
  %v180 = vunpack.c.l.b16 %v109
  %v181 = vunpack.c.l.b16 %v110
  %v182 = vunpack.c.l.b16 %v111
  %v183 = vunpack.c.l.b16 %v112
  %v184 = vunpack.c.l.b16 %v113
  %v185 = vunpack.c.l.b16 %v114
  %v186 = vunpack.c.l.b16 %v115
  %v187 = vunpack.c.l.b16 %v116
  %v188 = vunpack.c.l.b16 %v117
  %v189 = vunpack.c.l.b16 %v118
  %v190 = vunpack.c.l.b16 %v119
  %v191 = vunpack.c.l.b16 %v120
  %v192 = vunpack.c.l.b16 %v121
  %v193 = vunpack.c.l.b16 %v122
  %v194 = vunpack.c.l.b16 %v123
  %v195 = vunpack.c.l.b16 %v124
  %v196 = vunpack.c.l.b16 %v125
  %v197 = vunpack.c.l.b16 %v126
  %v198 = vunpack.c.l.b16 %v127
  %v199 = vunpack.c.l.b16 %v128
  %v200 = vunpack.c.l.b16 %v129
  %v201 = vunpack.c.l.b16 %v130
  %v202 = vunpack.c.l.b16 %v131
  %v203 = vunpack.c.l.b16 %v132
  %v204 = vunpack.c.l.b16 %v133
  %v205 = vunpack.c.l.b16 %v134
  %v206 = vunpack.c.l.b16 %v135
  %v207 = vunpack.c.l.b16 %v136
  %v208 = vunpack.c.l.b16 %v137
  %v209 = vunpack.c.l.b16 %v138
  %v210 = vunpack.c.l.b16 %v139
  %v211 = vunpack.c.l.b16 %v140
  %v212 = vpack.c.b16 %v181, %v180
  %v213 = vpack.c.b16 %v183, %v182
  %v214 = vpack.c.b16 %v185, %v184
  %v215 = vpack.c.b16 %v187, %v186
  %v216 = vpack.c.b16 %v189, %v188
  %v217 = vpack.c.b16 %v191, %v190
  %v218 = vpack.c.b16 %v193, %v192
  %v219 = vpack.c.b16 %v195, %v194
  %v220 = vpack.c.b16 %v197, %v196
  %v221 = vpack.c.b16 %v199, %v198
  %v222 = vpack.c.b16 %v201, %v200
  %v223 = vpack.c.b16 %v203, %v202
  %v224 = vpack.c.b16 %v205, %v204
  %v225 = vpack.c.b16 %v207, %v206
  %v226 = vpack.c.b16 %v209, %v208
  %v227 = vpack.c.b16 %v211, %v210
  %244 = vmatprep.subr.bf16.mxu0 0
  %245 = vmatpush1.bf16.msra.mxu0 %v219
  %246 = vmatprep.subr.bf16.mxu0 0
  %247 = vmatpush1.bf16.msra.mxu0 %v218
  %248 = vmatprep.subr.bf16.mxu0 0
  %249 = vmatpush1.bf16.msra.mxu0 %v217
  %250 = vmatprep.subr.bf16.mxu0 0
  %251 = vmatpush1.bf16.msra.mxu0 %v216
  %252 = vmatprep.subr.bf16.mxu0 0
  %253 = vmatpush1.bf16.msra.mxu0 %v215
  %254 = vmatprep.subr.bf16.mxu0 0
  %255 = vmatpush1.bf16.msra.mxu0 %v214
  %256 = vmatprep.subr.bf16.mxu0 0
  %257 = vmatpush1.bf16.msra.mxu0 %v213
  %258 = vmatprep.subr.bf16.mxu0 0
  %259 = vmatpush1.bf16.msra.mxu0 %v212
  %260 = vmatprep.subr.bf16.mxu0 0
  %261 = vmatpush2.bf16.msra.mxu0 %v227
  %262 = vmatprep.subr.bf16.mxu0 0
  %263 = vmatpush2.bf16.msra.mxu0 %v226
  %264 = vmatprep.subr.bf16.mxu0 0
  %265 = vmatpush2.bf16.msra.mxu0 %v225
  %266 = vmatprep.subr.bf16.mxu0 0
  %267 = vmatpush2.bf16.msra.mxu0 %v224
  %268 = vmatprep.subr.bf16.mxu0 0
  %269 = vmatpush2.bf16.msra.mxu0 %v223
  %270 = vmatprep.subr.bf16.mxu0 0
  %271 = vmatpush2.bf16.msra.mxu0 %v222
  %272 = vmatprep.subr.bf16.mxu0 0
  %273 = vmatpush2.bf16.msra.mxu0 %v221
  %274 = vmatprep.subr.bf16.mxu0 0
  %275 = vmatpush2.bf16.msra.mxu0 %v220
  %276 = vmatprep.mubr.bf16.mxu0 %v108
  %277 = vmatmul.mubr.bf16.gmra.mxu0 %v107
  %v278 = vpop.f32.mrf.mxu0
  %v279 = vadd.f32 %v146, %v278
  %v280 = vpop.f32.mrf.mxu0
  %v281 = vpop.f32.mrf.mxu0
  %v282 = vpop.f32.mrf.mxu0
  %283 = vdwg.mxu0
  %v284 = vmax.f32 %v279, 0.0
  %v285 = vpack.c.bf16 %v284, %v284
  %v286 = vld [vmem:[%s5] sm:$0xf]
  %v287 = vld [vmem:[%s5 + $0x4] sm:$0xf]
  %v288 = vld [vmem:[%s5 + $0x8] sm:$0xf]
  %v289 = vld [vmem:[%s5 + $0xc] sm:$0xf]
  %v290 = vld [vmem:[%s5 + $0x10] sm:$0xf]
  %v291 = vld [vmem:[%s5 + $0x14] sm:$0xf]
  %v292 = vld [vmem:[%s5 + $0x18] sm:$0xf]
  %v293 = vld [vmem:[%s5 + $0x1c] sm:$0xf]
  %v294 = vld [vmem:[%s5 + $0x20] sm:$0xf]
  %v295 = vld [vmem:[%s5 + $0x24] sm:$0xf]
  %v296 = vld [vmem:[%s5 + $0x28] sm:$0xf]
  %v297 = vld [vmem:[%s5 + $0x2c] sm:$0xf]
  %v298 = vld [vmem:[%s5 + $0x30] sm:$0xf]
  %v299 = vld [vmem:[%s5 + $0x34] sm:$0xf]
  %v300 = vld [vmem:[%s5 + $0x38] sm:$0xf]
  %v301 = vld [vmem:[%s5 + $0x3c] sm:$0xf]
  %v302 = vld [vmem:[%s6] sm:$0x1]
  %v304 = vlaneseq
  %v305 = vshrl.u32 %v304, 7
  %v306 = vsub.s32 0, %v305
  %v307 = vrot.slane %v302, %v306
  %v325 = vunpack.c.l.b16 %v286
  %v326 = vunpack.c.l.b16 %v287
  %v327 = vunpack.c.l.b16 %v288
  %v328 = vunpack.c.l.b16 %v289
  %v329 = vunpack.c.l.b16 %v290
  %v330 = vunpack.c.l.b16 %v291
  %v331 = vunpack.c.l.b16 %v292
  %v332 = vunpack.c.l.b16 %v293
  %v333 = vunpack.c.l.b16 %v294
  %v334 = vunpack.c.l.b16 %v295
  %v335 = vunpack.c.l.b16 %v296
  %v336 = vunpack.c.l.b16 %v297
  %v337 = vunpack.c.l.b16 %v298
  %v338 = vunpack.c.l.b16 %v299
  %v339 = vunpack.c.l.b16 %v300
  %v340 = vunpack.c.l.b16 %v301
  %v341 = vpack.c.b16 %v326, %v325
  %v342 = vpack.c.b16 %v328, %v327
  %v343 = vpack.c.b16 %v330, %v329
  %v344 = vpack.c.b16 %v332, %v331
  %v345 = vpack.c.b16 %v334, %v333
  %v346 = vpack.c.b16 %v336, %v335
  %v347 = vpack.c.b16 %v338, %v337
  %v348 = vpack.c.b16 %v340, %v339
  %357 = vmatprep.subr.bf16.mxu0 0
  %358 = vmatpush1.bf16.msra.mxu0 %v348
  %359 = vmatprep.subr.bf16.mxu0 0
  %360 = vmatpush1.bf16.msra.mxu0 %v347
  %361 = vmatprep.subr.bf16.mxu0 0
  %362 = vmatpush1.bf16.msra.mxu0 %v346
  %363 = vmatprep.subr.bf16.mxu0 0
  %364 = vmatpush1.bf16.msra.mxu0 %v345
  %365 = vmatprep.subr.bf16.mxu0 0
  %366 = vmatpush1.bf16.msra.mxu0 %v344
  %367 = vmatprep.subr.bf16.mxu0 0
  %368 = vmatpush1.bf16.msra.mxu0 %v343
  %369 = vmatprep.subr.bf16.mxu0 0
  %370 = vmatpush1.bf16.msra.mxu0 %v342
  %371 = vmatprep.subr.bf16.mxu0 0
  %372 = vmatpush1.bf16.msra.mxu0 %v341
  %373 = vmatprep.subr.bf16.mxu0 0
  %374 = vmatpush2.bf16.msra.mxu0 0
  %375 = vmatprep.subr.bf16.mxu0 0
  %376 = vmatpush2.bf16.msra.mxu0 0
  %377 = vmatprep.subr.bf16.mxu0 0
  %378 = vmatpush2.bf16.msra.mxu0 0
  %379 = vmatprep.subr.bf16.mxu0 0
  %380 = vmatpush2.bf16.msra.mxu0 0
  %381 = vmatprep.subr.bf16.mxu0 0
  %382 = vmatpush2.bf16.msra.mxu0 0
  %383 = vmatprep.subr.bf16.mxu0 0
  %384 = vmatpush2.bf16.msra.mxu0 0
  %385 = vmatprep.subr.bf16.mxu0 0
  %386 = vmatpush2.bf16.msra.mxu0 0
  %387 = vmatprep.subr.bf16.mxu0 0
  %388 = vmatpush2.bf16.msra.mxu0 0
  %389 = vmatprep.mubr.bf16.mxu0 0
  %390 = vmatmul.mubr.bf16.gmra.mxu0 %v285
  %v391 = vpop.f32.mrf.mxu0
  %v392 = vadd.f32 %v307, %v391
  %v393 = vpop.f32.mrf.mxu0
  %v394 = vpop.f32.mrf.mxu0
  %v395 = vpop.f32.mrf.mxu0
  %396 = vdwg.mxu0
  %397 = vst [vmem:[%s7] sm:$0xff] %v392
  // Predicated region
  $region22: #{gnn_forward.9} parent=0 // pred_check
    _
  $region23: #{gnn_forward.9} parent=0 // pred_check_branch
    %399 = sbr.rel (0) target = $region25
  $region24: #{gnn_forward.9} parent=0 // pred_region
    _
  $region25: #{gnn_forward.9} parent=0 // pred_fallthru
    _
  // Predicated region
  $region26: #{gnn_forward.9} parent=0 // pred_check
    _
  $region27: #{gnn_forward.9} parent=0 // pred_check_branch
    %401 = sbr.rel (0) target = $region29
  $region28: #{gnn_forward.9} parent=0 // pred_region
    _
  $region29: #{gnn_forward.9} parent=0 // pred_fallthru
    _

</llo_original>
